<compile_context>
chip_gen: v7x
topology: tpu7x:2x2x1
jax: 0.10.0
libtpu: 0.0.40
codegen_flags: <defaults>
</compile_context>

<pallas_src>
import functools
import math

import jax
import jax.numpy as jnp
from jax import lax
from jax.experimental import pallas as pl
from jax.experimental.pallas import tpu as pltpu


# --------------------------------------------------------------------------
# In-kernel helpers
# --------------------------------------------------------------------------
def _layer_norm(x, gamma, beta, eps=1e-5):
    # x: (R, E) f32; gamma/beta: (1, E). Biased variance (matches torch LayerNorm).
    mu = jnp.mean(x, axis=-1, keepdims=True)
    var = jnp.mean((x - mu) * (x - mu), axis=-1, keepdims=True)
    return (x - mu) * lax.rsqrt(var + eps) * gamma + beta


# --------------------------------------------------------------------------
# Fused transformer stack (+ optional fused LM head)
#   grid = (num_row_blocks ["parallel"], num_layers ["arbitrary"])
# --------------------------------------------------------------------------
def jarvis_stack_kernel(
    x_ref, mask_ref, colmask_ref,
    wqkv_ref, bqkv_ref, wo_ref, bo_ref,
    ln1g_ref, ln1b_ref,
    wf1_ref, bf1_ref, wf2_ref, bf2_ref,
    ln2g_ref, ln2b_ref,
    *rest,
    num_heads, fuse_head,
):
    if fuse_head:
        wh_ref, bh_ref, o_ref, acc_ref = rest
    else:
        (o_ref,) = rest
        acc_ref = o_ref          # output block doubles as the resident accumulator

    layer = pl.program_id(1)
    R, E = x_ref.shape           # rows in this row block, embed dim
    H = num_heads
    bf16 = jnp.bfloat16

    # ---- initialize the resident activation at the first layer ----
    @pl.when(layer == 0)
    def _():
        acc_ref[...] = x_ref[...]

    x = acc_ref[...]                                        # (R, E) f32
    xb = x.astype(bf16)

    # ---- fused QKV projection (1/sqrt(head_dim) pre-folded into Q weights) ----
    qkv = jnp.dot(xb, wqkv_ref[...],
                  preferred_element_type=jnp.float32) + bqkv_ref[...]   # (R, 3E)
    q = qkv[:, :E]                                          # lane-aligned slices
    k = qkv[:, E:2 * E].astype(bf16)
    v = qkv[:, 2 * E:].astype(bf16)

    colmask = colmask_ref[...]                              # (H, 1, E) 0/1 per head

    # ---- attention: head-expanded Q, one full-depth MXU matmul for all heads ----
    # q_exp row block h keeps only head h's columns of q; scores[h*R+i, m] is the
    # per-head score between query row i and key row m.
    q_exp = (q[None] * colmask).reshape(H * R, E).astype(bf16)          # (H*R, E)
    scores = jnp.einsum('ne,me->nm', q_exp, k,
                        preferred_element_type=jnp.float32)             # (H*R, R)
    scores = scores.reshape(H, R, R) + mask_ref[...]        # causal + batch-block bias
    scores = scores - jnp.max(scores, axis=-1, keepdims=True)
    p = jnp.exp(scores)
    p = p * pl.reciprocal(jnp.sum(p, axis=-1, keepdims=True), approx=True)

    ctx = jnp.einsum('nm,me->ne', p.reshape(H * R, R).astype(bf16), v,
                     preferred_element_type=jnp.float32)                # (H*R, E)
    # Merge heads: keep head h's own columns from its row block and sum (no concat).
    attn = jnp.sum(ctx.reshape(H, R, E) * colmask, axis=0)              # (R, E) f32

    # ---- output projection + residual + LayerNorm1 ----
    attn_out = jnp.dot(attn.astype(bf16), wo_ref[...],
                       preferred_element_type=jnp.float32) + bo_ref[...]
    x1 = _layer_norm(x + attn_out, ln1g_ref[...], ln1b_ref[...])

    # ---- FFN (Linear -> ReLU -> Linear) + residual + LayerNorm2 ----
    h1 = jnp.dot(x1.astype(bf16), wf1_ref[...],
                 preferred_element_type=jnp.float32) + bf1_ref[...]
    h1 = jnp.maximum(h1, 0.0)
    ff = jnp.dot(h1.astype(bf16), wf2_ref[...],
                 preferred_element_type=jnp.float32) + bf2_ref[...]
    x2 = _layer_norm(x1 + ff, ln2g_ref[...], ln2b_ref[...])

    acc_ref[...] = x2

    if fuse_head:
        # ---- fused LM head at the last layer: logits = x2 @ Wh + bh ----
        @pl.when(layer == pl.num_programs(1) - 1)
        def _():
            o_ref[...] = (
                jnp.dot(x2.astype(bf16), wh_ref[...],
                        preferred_element_type=jnp.float32) + bh_ref[...]
            ).astype(o_ref.dtype)


def jarvis_stack(x2d, params, *, batch, seq_len, num_heads,
                 num_row_blocks=1, fuse_head=True):
    """x2d: (B*S, E) f32, batch-major rows.  Returns logits (B*S, V) if
    fuse_head else final activations (B*S, E)."""
    BS, E = x2d.shape
    L = params["wqkv"].shape[0]
    F = params["wf1"].shape[2]
    V = params["head_w_t"].shape[1]
    assert E % num_heads == 0
    head_dim = E // num_heads

    # Row-block split must keep whole sequences together and 8-row alignment.
    if num_row_blocks > 1 and (
            batch % num_row_blocks or ((batch // num_row_blocks) * seq_len) % 8):
        num_row_blocks = 1
    bpb = batch // num_row_blocks           # batches per row block
    R = bpb * seq_len                       # rows per row block
    H = num_heads

    # Additive attention bias: allow iff same batch AND causal (key <= query).
    row = jnp.arange(R)
    same_batch = (row[:, None] // seq_len) == (row[None, :] // seq_len)
    allowed = same_batch & (row[None, :] <= row[:, None])
    mask = jnp.where(allowed, 0.0, -1e30).astype(jnp.float32)           # (R, R)
    # Per-head 0/1 column mask over the embedding dim.
    colmask = (
        (jnp.arange(E)[None, :] // head_dim) == jnp.arange(H)[:, None]
    ).astype(jnp.float32)[:, None, :]                                   # (H, 1, E)

    def stacked(*shape):
        z = (0,) * len(shape)
        return pl.BlockSpec((pl.Squeezed(),) + shape, lambda r, l, z=z: (l,) + z)

    def const(*shape):
        z = (0,) * len(shape)
        return pl.BlockSpec(shape, lambda r, l, z=z: z)

    def per_rows(cols):
        return pl.BlockSpec((R, cols), lambda r, l: (r, 0))

    in_specs = [
        per_rows(E),                         # x
        const(R, R),                         # attention bias
        const(H, 1, E),                      # per-head column mask
        stacked(E, 3 * E), stacked(1, 3 * E),        # wqkv / bqkv
        stacked(E, E), stacked(1, E),                # wo / bo
        stacked(1, E), stacked(1, E),                # ln1 gamma / beta
        stacked(E, F), stacked(1, F),                # wf1 / bf1
        stacked(F, E), stacked(1, E),                # wf2 / bf2
        stacked(1, E), stacked(1, E),                # ln2 gamma / beta
    ]
    args = [
        x2d, mask, colmask,
        params["wqkv"], params["bqkv"], params["wo"], params["bo"],
        params["ln1_g"], params["ln1_b"],
        params["wf1"], params["bf1"], params["wf2"], params["bf2"],
        params["ln2_g"], params["ln2_b"],
    ]
    if fuse_head:
        in_specs += [const(E, V), const(1, V)]
        args += [params["head_w_t"], params["head_b"]]
        out_shape = jax.ShapeDtypeStruct((BS, V), jnp.float32)
        out_specs = pl.BlockSpec((R, V), lambda r, l: (r, 0))
        scratch_shapes = [pltpu.VMEM((R, E), jnp.float32)]
    else:
        out_shape = jax.ShapeDtypeStruct((BS, E), jnp.float32)
        out_specs = pl.BlockSpec((R, E), lambda r, l: (r, 0))
        scratch_shapes = []

    # Advisory cost estimate (helps XLA schedule around the custom call).
    matmul_flops = L * (
        2 * BS * E * 3 * E + 2 * BS * E * E + 4 * BS * E * F
        + num_row_blocks * 4 * (H * R) * R * E)
    if fuse_head:
        matmul_flops += 2 * BS * E * V
    cost = pl.CostEstimate(
        flops=int(matmul_flops),
        transcendentals=int(L * num_row_blocks * H * R * R),
        bytes_accessed=int(
            2 * L * (3 * E * E + E * E + 2 * E * F)
            + 4 * L * (3 * E + E + F + 5 * E)
            + 4 * BS * E
            + ((2 * E * V + 4 * V + 4 * BS * V) if fuse_head else 4 * BS * E)),
    )

    # VMEM budget: double-buffered per-layer weights + resident head/activations.
    vmem_bytes = (
        2 * 2 * (E * 3 * E + E * E + 2 * E * F)
        + 4 * 2 * (3 * E + E + F + 5 * E)
        + (2 * (2 * E * V + 4 * V) if fuse_head else 0)
        + 4 * R * (E + 3 * E + F)
        + 8 * H * R * (R + E)
        + 8 * R * (V if fuse_head else E))
    vmem_limit = int(min(64 * 2**20, max(16 * 2**20, 2 * vmem_bytes)))

    kernel = functools.partial(jarvis_stack_kernel,
                               num_heads=num_heads, fuse_head=fuse_head)

    return pl.pallas_call(
        kernel,
        out_shape=out_shape,
        grid_spec=pltpu.PrefetchScalarGridSpec(
            num_scalar_prefetch=0,
            grid=(num_row_blocks, L),
            in_specs=in_specs,
            out_specs=out_specs,
            scratch_shapes=scratch_shapes,
        ),
        compiler_params=pltpu.CompilerParams(
            dimension_semantics=("parallel", "arbitrary"),
            vmem_limit_bytes=vmem_limit,
        ),
        cost_estimate=cost,
    )(*args)


# --------------------------------------------------------------------------
# Fallback LM head (only used when the vocab is too large to fuse):
# logits = x @ W_head^T + b, tiled over the vocab dimension.
# --------------------------------------------------------------------------
def lm_head_kernel(x_ref, w_ref, b_ref, o_ref):
    o_ref[...] = (
        jnp.dot(x_ref[...].astype(jnp.bfloat16), w_ref[...],
                preferred_element_type=jnp.float32) + b_ref[...]
    ).astype(o_ref.dtype)


def lm_head(x2d, w_t, b_row, *, vocab_tile=1024):
    """x2d: (B*S, E) f32; w_t: (E, V) bf16 pre-transposed; b_row: (1, V) f32."""
    BS, E = x2d.shape
    V = w_t.shape[1]
    TV = V
    for cand in (2048, 1024, 512, 256, 128):   # prefer big tiles (amortize grid step)
        if cand <= vocab_tile and V % cand == 0:
            TV = cand
            break
    cost = pl.CostEstimate(flops=2 * BS * E * V, transcendentals=0,
                           bytes_accessed=2 * E * V + 4 * V + 4 * BS * E + 4 * BS * V)
    return pl.pallas_call(
        lm_head_kernel,
        out_shape=jax.ShapeDtypeStruct((BS, V), jnp.float32),
        grid_spec=pltpu.PrefetchScalarGridSpec(
            num_scalar_prefetch=0,
            grid=(V // TV,),
            in_specs=[
                pl.BlockSpec((BS, E), lambda v: (0, 0)),
                pl.BlockSpec((E, TV), lambda v: (0, v)),
                pl.BlockSpec((1, TV), lambda v: (0, v)),
            ],
            out_specs=pl.BlockSpec((BS, TV), lambda v: (0, v)),
        ),
        compiler_params=pltpu.CompilerParams(dimension_semantics=("parallel",)),
        cost_estimate=cost,
    )(x2d, w_t, b_row)


# --------------------------------------------------------------------------
# Glue: positional encoding, parameters, forward
# --------------------------------------------------------------------------
def positional_encoding_table(max_len, d_model):
    position = jnp.arange(max_len, dtype=jnp.float32)[:, None]
    div_term = jnp.exp(
        jnp.arange(0, d_model, 2, dtype=jnp.float32) * (-math.log(10000.0) / d_model))
    pe = jnp.zeros((max_len, d_model), dtype=jnp.float32)
    pe = pe.at[:, 0::2].set(jnp.sin(position * div_term))
    pe = pe.at[:, 1::2].set(jnp.cos(position * div_term))
    return pe


def init_params(key, vocab_size, embed_dim, ff_hidden, num_layers, num_heads):
    """Synthetic parameters.  Linear weights stored pre-transposed as [in, out],
    stacked along a leading layer axis, cast to bf16; the 1/sqrt(head_dim)
    attention scale is pre-folded into the Q projection columns."""
    scale = 0.02
    L, E, F, V = num_layers, embed_dim, ff_hidden, vocab_size
    head_dim = E // num_heads
    ks = jax.random.split(key, 6)
    bf16 = jnp.bfloat16

    def w(k, shape):
        return jax.random.normal(k, shape, jnp.float32) * scale

    wqkv = w(ks[2], (L, E, 3 * E))
    wqkv = wqkv.at[:, :, :E].multiply(1.0 / math.sqrt(head_dim))   # fold Q scale

    return {
        "embedding": w(ks[0], (V, E)),
        "head_w_t": w(ks[1], (E, V)).astype(bf16),
        "head_b": jnp.zeros((1, V), jnp.float32),
        "wqkv": wqkv.astype(bf16),
        "bqkv": jnp.zeros((L, 1, 3 * E), jnp.float32),
        "wo": w(ks[3], (L, E, E)).astype(bf16),
        "bo": jnp.zeros((L, 1, E), jnp.float32),
        "ln1_g": jnp.ones((L, 1, E), jnp.float32),
        "ln1_b": jnp.zeros((L, 1, E), jnp.float32),
        "wf1": w(ks[4], (L, E, F)).astype(bf16),
        "bf1": jnp.zeros((L, 1, F), jnp.float32),
        "wf2": w(ks[5], (L, F, E)).astype(bf16),
        "bf2": jnp.zeros((L, 1, E), jnp.float32),
        "ln2_g": jnp.ones((L, 1, E), jnp.float32),
        "ln2_b": jnp.zeros((L, 1, E), jnp.float32),
    }


def _tensorcores_per_chip():
    # Megacore chips (v4 / v5p / v7x) expose 2 TensorCores per device; give the
    # second core a parallel row-block.  Single-TC chips keep 1 (no loop overhead).
    try:
        kind = jax.devices()[0].device_kind.lower()
    except Exception:
        return 1
    return 2 if any(tag in kind for tag in ("v4", "v5p", "v7")) else 1


def jarvis_forward(token_ids, params, pe_table, *, num_heads, num_row_blocks=1):
    """token_ids: (B, S) int32 -> logits (B, S, V)."""
    B, S = token_ids.shape
    E = params["embedding"].shape[1]
    V = params["head_w_t"].shape[1]
    # Embedding gather + positional encoding (cheap glue, plain JAX).
    x = jnp.take(params["embedding"], token_ids, axis=0) + pe_table[None, :S, :]
    x2d = x.reshape(B * S, E)
    # Fuse the LM head when its weights comfortably fit the VMEM budget.
    fuse_head = (2 * E * V + 4 * V) <= 8 * 2**20
    out2d = jarvis_stack(x2d, params, batch=B, seq_len=S, num_heads=num_heads,
                         num_row_blocks=num_row_blocks, fuse_head=fuse_head)
    if not fuse_head:
        out2d = lm_head(out2d, params["head_w_t"], params["head_b"])
    return out2d.reshape(B, S, V)


# --------------------------------------------------------------------------
if __name__ == "__main__":
    # Default module config (embed 128 / heads 4 / ff 512 / 4 layers), small B/S.
    VOCAB = 128
    EMBED_DIM = 128
    NUM_HEADS = 4
    FF_HIDDEN = 512
    NUM_LAYERS = 4
    MAX_LEN = 64
    BATCH = 2
    SEQ = 8

    key = jax.random.PRNGKey(0)
    key, k_tok = jax.random.split(key)
    params = init_params(key, VOCAB, EMBED_DIM, FF_HIDDEN, NUM_LAYERS, NUM_HEADS)
    pe_table = positional_encoding_table(MAX_LEN, EMBED_DIM)
    token_ids = jax.random.randint(k_tok, (BATCH, SEQ), 0, VOCAB, dtype=jnp.int32)

    ncores = _tensorcores_per_chip()
    num_row_blocks = ncores if BATCH % ncores == 0 else 1

    fwd = jax.jit(functools.partial(jarvis_forward, num_heads=NUM_HEADS,
                                    num_row_blocks=num_row_blocks))
    logits = fwd(token_ids, params, pe_table)
    jax.block_until_ready(logits)

    assert logits.shape == (BATCH, SEQ, VOCAB), logits.shape
    assert bool(jnp.all(jnp.isfinite(logits)))
    print("KERNEL_OK")
</pallas_src>

<mosaic_0001>
module attributes {stable_mosaic.version = 11 : i64} {
  func.func @jarvis_stack_kernel(%arg0: i32, %arg1: i32, %arg2: memref<16x128xf32, #tpu.memory_space<vmem>>, %arg3: memref<16x16xf32, #tpu.memory_space<vmem>>, %arg4: memref<4x1x128xf32, #tpu.memory_space<vmem>>, %arg5: memref<1x128x384xbf16, #tpu.memory_space<vmem>>, %arg6: memref<1x1x384xf32, #tpu.memory_space<vmem>>, %arg7: memref<1x128x128xbf16, #tpu.memory_space<vmem>>, %arg8: memref<1x1x128xf32, #tpu.memory_space<vmem>>, %arg9: memref<1x1x128xf32, #tpu.memory_space<vmem>>, %arg10: memref<1x1x128xf32, #tpu.memory_space<vmem>>, %arg11: memref<1x128x512xbf16, #tpu.memory_space<vmem>>, %arg12: memref<1x1x512xf32, #tpu.memory_space<vmem>>, %arg13: memref<1x512x128xbf16, #tpu.memory_space<vmem>>, %arg14: memref<1x1x128xf32, #tpu.memory_space<vmem>>, %arg15: memref<1x1x128xf32, #tpu.memory_space<vmem>>, %arg16: memref<1x1x128xf32, #tpu.memory_space<vmem>>, %arg17: memref<128x128xbf16, #tpu.memory_space<vmem>>, %arg18: memref<1x128xf32, #tpu.memory_space<vmem>>, %arg19: memref<16x128xf32, #tpu.memory_space<vmem>>, %arg20: memref<16x128xf32, #tpu.memory_space<vmem>>) attributes {dimension_semantics = [#tpu.dimension_semantics<parallel>, #tpu.dimension_semantics<arbitrary>], iteration_bounds = array<i64: 1, 4>, scalar_prefetch = 0 : i64, scratch_operands = 1 : i64, tpu.core_type = #tpu.core_type<tc>, window_params = [{transform_indices = @transform_0, window_bounds = array<i64: 16, 128>}, {pipeline_mode = #tpu.pipeline_mode<synchronous>, transform_indices = @transform_1, window_bounds = array<i64: 16, 16>}, {pipeline_mode = #tpu.pipeline_mode<synchronous>, transform_indices = @transform_2, window_bounds = array<i64: 4, 1, 128>}, {transform_indices = @transform_3, window_bounds = array<i64: 1, 128, 384>}, {transform_indices = @transform_4, window_bounds = array<i64: 1, 1, 384>}, {transform_indices = @transform_5, window_bounds = array<i64: 1, 128, 128>}, {transform_indices = @transform_6, window_bounds = array<i64: 1, 1, 128>}, {transform_indices = @transform_7, window_bounds = array<i64: 1, 1, 128>}, {transform_indices = @transform_8, window_bounds = array<i64: 1, 1, 128>}, {transform_indices = @transform_9, window_bounds = array<i64: 1, 128, 512>}, {transform_indices = @transform_10, window_bounds = array<i64: 1, 1, 512>}, {transform_indices = @transform_11, window_bounds = array<i64: 1, 512, 128>}, {transform_indices = @transform_12, window_bounds = array<i64: 1, 1, 128>}, {transform_indices = @transform_13, window_bounds = array<i64: 1, 1, 128>}, {transform_indices = @transform_14, window_bounds = array<i64: 1, 1, 128>}, {pipeline_mode = #tpu.pipeline_mode<synchronous>, transform_indices = @transform_15, window_bounds = array<i64: 128, 128>}, {pipeline_mode = #tpu.pipeline_mode<synchronous>, transform_indices = @transform_16, window_bounds = array<i64: 1, 128>}, {transform_indices = @transform_17, window_bounds = array<i64: 16, 128>}]} {
    %c0_i32 = arith.constant 0 : i32
    %0 = arith.cmpi eq, %arg1, %c0_i32 : i32
    %1 = arith.extui %0 : i1 to i32
    %c0_i32_0 = arith.constant 0 : i32
    %2 = arith.cmpi ne, %1, %c0_i32_0 : i32
    scf.if %2 {
      %c0_65 = arith.constant 0 : index
      %c0_66 = arith.constant 0 : index
      %135 = vector.load %arg2[%c0_65, %c0_66] : memref<16x128xf32, #tpu.memory_space<vmem>>, vector<16x128xf32>
      %c0_67 = arith.constant 0 : index
      %c0_68 = arith.constant 0 : index
      %136 = vector.load %arg20[%c0_67, %c0_68] : memref<16x128xf32, #tpu.memory_space<vmem>>, vector<16x128xf32>
      tpu.vector_store %arg20[%c0_67, %c0_68], %135 {strides = array<i32>} : memref<16x128xf32, #tpu.memory_space<vmem>>, vector<16x128xf32>,
    } else {
    }
    %c0 = arith.constant 0 : index
    %c0_1 = arith.constant 0 : index
    %3 = vector.load %arg20[%c0, %c0_1] : memref<16x128xf32, #tpu.memory_space<vmem>>, vector<16x128xf32>
    %4 = arith.truncf %3 : vector<16x128xf32> to vector<16x128xbf16>
    %c0_2 = arith.constant 0 : index
    %c0_3 = arith.constant 0 : index
    %c0_4 = arith.constant 0 : index
    %5 = vector.load %arg5[%c0_2, %c0_3, %c0_4] : memref<1x128x384xbf16, #tpu.memory_space<vmem>>, vector<1x128x384xbf16>
    %6 = vector.shape_cast %5 : vector<1x128x384xbf16> to vector<128x384xbf16>
    %cst = arith.constant dense<0.000000e+00> : vector<16x384xf32>
    %7 = tpu.matmul %4, %6, %cst {dimension_numbers = #tpu.dot_dimension_numbers<[1], [0], [0], [1], [0, 0, 1, 1], [], []>} : vector<16x128xbf16>, vector<128x384xbf16>, vector<16x384xf32> -> vector<16x384xf32>
    %c0_5 = arith.constant 0 : index
    %c0_6 = arith.constant 0 : index
    %c0_7 = arith.constant 0 : index
    %8 = vector.load %arg6[%c0_5, %c0_6, %c0_7] : memref<1x1x384xf32, #tpu.memory_space<vmem>>, vector<1x1x384xf32>
    %9 = vector.shape_cast %8 : vector<1x1x384xf32> to vector<1x384xf32>
    %10 = vector.broadcast %9 : vector<1x384xf32> to vector<16x384xf32>
    %11 = arith.addf %7, %10 : vector<16x384xf32>
    %12 = vector.extract_strided_slice %11 {offsets = [0, 0], sizes = [16, 128], strides = [1, 1]} : vector<16x384xf32> to vector<16x128xf32>
    %13 = vector.extract_strided_slice %11 {offsets = [0, 128], sizes = [16, 128], strides = [1, 1]} : vector<16x384xf32> to vector<16x128xf32>
    %14 = arith.truncf %13 : vector<16x128xf32> to vector<16x128xbf16>
    %15 = vector.extract_strided_slice %11 {offsets = [0, 256], sizes = [16, 128], strides = [1, 1]} : vector<16x384xf32> to vector<16x128xf32>
    %16 = arith.truncf %15 : vector<16x128xf32> to vector<16x128xbf16>
    %c0_8 = arith.constant 0 : index
    %c0_9 = arith.constant 0 : index
    %c0_10 = arith.constant 0 : index
    %17 = vector.load %arg4[%c0_8, %c0_9, %c0_10] : memref<4x1x128xf32, #tpu.memory_space<vmem>>, vector<4x1x128xf32>
    %18 = vector.shape_cast %12 : vector<16x128xf32> to vector<1x16x128xf32>
    %19 = vector.broadcast %18 : vector<1x16x128xf32> to vector<4x16x128xf32>
    %20 = vector.broadcast %17 : vector<4x1x128xf32> to vector<4x16x128xf32>
    %21 = arith.mulf %19, %20 : vector<4x16x128xf32>
    %22 = vector.shape_cast %21 : vector<4x16x128xf32> to vector<64x128xf32>
    %23 = arith.truncf %22 : vector<64x128xf32> to vector<64x128xbf16>
    "tpu.trace_start"() <{level = 10 : i32, message = "ne,me->nm"}> : () -> ()
    %cst_11 = arith.constant dense<0.000000e+00> : vector<64x16xf32>
    %24 = tpu.matmul %23, %14, %cst_11 {dimension_numbers = #tpu.dot_dimension_numbers<[1], [1], [0], [0], [0, 0, 1, 0], [], []>} : vector<64x128xbf16>, vector<16x128xbf16>, vector<64x16xf32> -> vector<64x16xf32>
    "tpu.trace_stop"() : () -> ()
    %25 = vector.shape_cast %24 : vector<64x16xf32> to vector<4x16x16xf32>
    %c0_12 = arith.constant 0 : index
    %c0_13 = arith.constant 0 : index
    %26 = vector.load %arg3[%c0_12, %c0_13] : memref<16x16xf32, #tpu.memory_space<vmem>>, vector<16x16xf32>
    %27 = vector.shape_cast %26 : vector<16x16xf32> to vector<1x16x16xf32>
    %28 = vector.broadcast %27 : vector<1x16x16xf32> to vector<4x16x16xf32>
    %29 = arith.addf %25, %28 : vector<4x16x16xf32>
    %cst_14 = arith.constant dense<0xFF800000> : vector<4x16xf32>
    %30 = vector.multi_reduction <maximumf>, %29, %cst_14 [2] : vector<4x16x16xf32> to vector<4x16xf32>
    %31 = vector.shape_cast %30 : vector<4x16xf32> to vector<4x16x1xf32>
    %32 = vector.broadcast %31 : vector<4x16x1xf32> to vector<4x16x16xf32>
    %33 = arith.subf %29, %32 : vector<4x16x16xf32>
    %34 = math.exp %33 : vector<4x16x16xf32>
    %cst_15 = arith.constant dense<0.000000e+00> : vector<4x16xf32>
    %35 = vector.multi_reduction <add>, %34, %cst_15 [2] : vector<4x16x16xf32> to vector<4x16xf32>
    %36 = vector.shape_cast %35 : vector<4x16xf32> to vector<4x16x1xf32>
    %37 = tpu.reciprocal %36 {approx = true} : vector<4x16x1xf32> -> vector<4x16x1xf32>
    %38 = vector.broadcast %37 : vector<4x16x1xf32> to vector<4x16x16xf32>
    %39 = arith.mulf %34, %38 : vector<4x16x16xf32>
    %40 = vector.shape_cast %39 : vector<4x16x16xf32> to vector<64x16xf32>
    %41 = arith.truncf %40 : vector<64x16xf32> to vector<64x16xbf16>
    "tpu.trace_start"() <{level = 10 : i32, message = "nm,me->ne"}> : () -> ()
    %cst_16 = arith.constant dense<0.000000e+00> : vector<64x128xf32>
    %42 = tpu.matmul %41, %16, %cst_16 {dimension_numbers = #tpu.dot_dimension_numbers<[1], [0], [0], [1], [0, 0, 1, 1], [], []>} : vector<64x16xbf16>, vector<16x128xbf16>, vector<64x128xf32> -> vector<64x128xf32>
    "tpu.trace_stop"() : () -> ()
    %43 = vector.shape_cast %42 : vector<64x128xf32> to vector<4x16x128xf32>
    %44 = vector.broadcast %17 : vector<4x1x128xf32> to vector<4x16x128xf32>
    %45 = arith.mulf %43, %44 : vector<4x16x128xf32>
    %cst_17 = arith.constant dense<0.000000e+00> : vector<16x128xf32>
    %46 = vector.multi_reduction <add>, %45, %cst_17 [0] : vector<4x16x128xf32> to vector<16x128xf32>
    %47 = arith.truncf %46 : vector<16x128xf32> to vector<16x128xbf16>
    %c0_18 = arith.constant 0 : index
    %c0_19 = arith.constant 0 : index
    %c0_20 = arith.constant 0 : index
    %48 = vector.load %arg7[%c0_18, %c0_19, %c0_20] : memref<1x128x128xbf16, #tpu.memory_space<vmem>>, vector<1x128x128xbf16>
    %49 = vector.shape_cast %48 : vector<1x128x128xbf16> to vector<128x128xbf16>
    %cst_21 = arith.constant dense<0.000000e+00> : vector<16x128xf32>
    %50 = tpu.matmul %47, %49, %cst_21 {dimension_numbers = #tpu.dot_dimension_numbers<[1], [0], [0], [1], [0, 0, 1, 1], [], []>} : vector<16x128xbf16>, vector<128x128xbf16>, vector<16x128xf32> -> vector<16x128xf32>
    %c0_22 = arith.constant 0 : index
    %c0_23 = arith.constant 0 : index
    %c0_24 = arith.constant 0 : index
    %51 = vector.load %arg8[%c0_22, %c0_23, %c0_24] : memref<1x1x128xf32, #tpu.memory_space<vmem>>, vector<1x1x128xf32>
    %52 = vector.shape_cast %51 : vector<1x1x128xf32> to vector<1x128xf32>
    %53 = vector.broadcast %52 : vector<1x128xf32> to vector<16x128xf32>
    %54 = arith.addf %50, %53 : vector<16x128xf32>
    %55 = arith.addf %3, %54 : vector<16x128xf32>
    %c0_25 = arith.constant 0 : index
    %c0_26 = arith.constant 0 : index
    %c0_27 = arith.constant 0 : index
    %56 = vector.load %arg9[%c0_25, %c0_26, %c0_27] : memref<1x1x128xf32, #tpu.memory_space<vmem>>, vector<1x1x128xf32>
    %57 = vector.shape_cast %56 : vector<1x1x128xf32> to vector<1x128xf32>
    %c0_28 = arith.constant 0 : index
    %c0_29 = arith.constant 0 : index
    %c0_30 = arith.constant 0 : index
    %58 = vector.load %arg10[%c0_28, %c0_29, %c0_30] : memref<1x1x128xf32, #tpu.memory_space<vmem>>, vector<1x1x128xf32>
    %59 = vector.shape_cast %58 : vector<1x1x128xf32> to vector<1x128xf32>
    %cst_31 = arith.constant dense<0.000000e+00> : vector<16xf32>
    %60 = vector.multi_reduction <add>, %55, %cst_31 [1] : vector<16x128xf32> to vector<16xf32>
    %61 = vector.shape_cast %60 : vector<16xf32> to vector<16x1xf32>
    %cst_32 = arith.constant 1.280000e+02 : f32
    %62 = vector.broadcast %cst_32 : f32 to vector<16x1xf32>
    %63 = arith.divf %61, %62 : vector<16x1xf32>
    %64 = vector.broadcast %63 : vector<16x1xf32> to vector<16x128xf32>
    %65 = arith.subf %55, %64 : vector<16x128xf32>
    %66 = vector.broadcast %63 : vector<16x1xf32> to vector<16x128xf32>
    %67 = arith.subf %55, %66 : vector<16x128xf32>
    %68 = arith.mulf %65, %67 : vector<16x128xf32>
    %cst_33 = arith.constant dense<0.000000e+00> : vector<16xf32>
    %69 = vector.multi_reduction <add>, %68, %cst_33 [1] : vector<16x128xf32> to vector<16xf32>
    %70 = vector.shape_cast %69 : vector<16xf32> to vector<16x1xf32>
    %cst_34 = arith.constant 1.280000e+02 : f32
    %71 = vector.broadcast %cst_34 : f32 to vector<16x1xf32>
    %72 = arith.divf %70, %71 : vector<16x1xf32>
    %73 = vector.broadcast %63 : vector<16x1xf32> to vector<16x128xf32>
    %74 = arith.subf %55, %73 : vector<16x128xf32>
    %cst_35 = arith.constant 9.99999974E-6 : f32
    %75 = vector.broadcast %cst_35 : f32 to vector<16x1xf32>
    %76 = arith.addf %72, %75 : vector<16x1xf32>
    %77 = math.rsqrt %76 : vector<16x1xf32>
    %78 = vector.broadcast %77 : vector<16x1xf32> to vector<16x128xf32>
    %79 = arith.mulf %74, %78 : vector<16x128xf32>
    %80 = vector.broadcast %57 : vector<1x128xf32> to vector<16x128xf32>
    %81 = arith.mulf %79, %80 : vector<16x128xf32>
    %82 = vector.broadcast %59 : vector<1x128xf32> to vector<16x128xf32>
    %83 = arith.addf %81, %82 : vector<16x128xf32>
    %84 = arith.truncf %83 : vector<16x128xf32> to vector<16x128xbf16>
    %c0_36 = arith.constant 0 : index
    %c0_37 = arith.constant 0 : index
    %c0_38 = arith.constant 0 : index
    %85 = vector.load %arg11[%c0_36, %c0_37, %c0_38] : memref<1x128x512xbf16, #tpu.memory_space<vmem>>, vector<1x128x512xbf16>
    %86 = vector.shape_cast %85 : vector<1x128x512xbf16> to vector<128x512xbf16>
    %cst_39 = arith.constant dense<0.000000e+00> : vector<16x512xf32>
    %87 = tpu.matmul %84, %86, %cst_39 {dimension_numbers = #tpu.dot_dimension_numbers<[1], [0], [0], [1], [0, 0, 1, 1], [], []>} : vector<16x128xbf16>, vector<128x512xbf16>, vector<16x512xf32> -> vector<16x512xf32>
    %c0_40 = arith.constant 0 : index
    %c0_41 = arith.constant 0 : index
    %c0_42 = arith.constant 0 : index
    %88 = vector.load %arg12[%c0_40, %c0_41, %c0_42] : memref<1x1x512xf32, #tpu.memory_space<vmem>>, vector<1x1x512xf32>
    %89 = vector.shape_cast %88 : vector<1x1x512xf32> to vector<1x512xf32>
    %90 = vector.broadcast %89 : vector<1x512xf32> to vector<16x512xf32>
    %91 = arith.addf %87, %90 : vector<16x512xf32>
    %cst_43 = arith.constant 0.000000e+00 : f32
    %92 = vector.broadcast %cst_43 : f32 to vector<16x512xf32>
    %93 = arith.maximumf %91, %92 : vector<16x512xf32>
    %94 = arith.truncf %93 : vector<16x512xf32> to vector<16x512xbf16>
    %c0_44 = arith.constant 0 : index
    %c0_45 = arith.constant 0 : index
    %c0_46 = arith.constant 0 : index
    %95 = vector.load %arg13[%c0_44, %c0_45, %c0_46] : memref<1x512x128xbf16, #tpu.memory_space<vmem>>, vector<1x512x128xbf16>
    %96 = vector.shape_cast %95 : vector<1x512x128xbf16> to vector<512x128xbf16>
    %cst_47 = arith.constant dense<0.000000e+00> : vector<16x128xf32>
    %97 = tpu.matmul %94, %96, %cst_47 {dimension_numbers = #tpu.dot_dimension_numbers<[1], [0], [0], [1], [0, 0, 1, 1], [], []>} : vector<16x512xbf16>, vector<512x128xbf16>, vector<16x128xf32> -> vector<16x128xf32>
    %c0_48 = arith.constant 0 : index
    %c0_49 = arith.constant 0 : index
    %c0_50 = arith.constant 0 : index
    %98 = vector.load %arg14[%c0_48, %c0_49, %c0_50] : memref<1x1x128xf32, #tpu.memory_space<vmem>>, vector<1x1x128xf32>
    %99 = vector.shape_cast %98 : vector<1x1x128xf32> to vector<1x128xf32>
    %100 = vector.broadcast %99 : vector<1x128xf32> to vector<16x128xf32>
    %101 = arith.addf %97, %100 : vector<16x128xf32>
    %102 = arith.addf %83, %101 : vector<16x128xf32>
    %c0_51 = arith.constant 0 : index
    %c0_52 = arith.constant 0 : index
    %c0_53 = arith.constant 0 : index
    %103 = vector.load %arg15[%c0_51, %c0_52, %c0_53] : memref<1x1x128xf32, #tpu.memory_space<vmem>>, vector<1x1x128xf32>
    %104 = vector.shape_cast %103 : vector<1x1x128xf32> to vector<1x128xf32>
    %c0_54 = arith.constant 0 : index
    %c0_55 = arith.constant 0 : index
    %c0_56 = arith.constant 0 : index
    %105 = vector.load %arg16[%c0_54, %c0_55, %c0_56] : memref<1x1x128xf32, #tpu.memory_space<vmem>>, vector<1x1x128xf32>
    %106 = vector.shape_cast %105 : vector<1x1x128xf32> to vector<1x128xf32>
    %cst_57 = arith.constant dense<0.000000e+00> : vector<16xf32>
    %107 = vector.multi_reduction <add>, %102, %cst_57 [1] : vector<16x128xf32> to vector<16xf32>
    %108 = vector.shape_cast %107 : vector<16xf32> to vector<16x1xf32>
    %cst_58 = arith.constant 1.280000e+02 : f32
    %109 = vector.broadcast %cst_58 : f32 to vector<16x1xf32>
    %110 = arith.divf %108, %109 : vector<16x1xf32>
    %111 = vector.broadcast %110 : vector<16x1xf32> to vector<16x128xf32>
    %112 = arith.subf %102, %111 : vector<16x128xf32>
    %113 = vector.broadcast %110 : vector<16x1xf32> to vector<16x128xf32>
    %114 = arith.subf %102, %113 : vector<16x128xf32>
    %115 = arith.mulf %112, %114 : vector<16x128xf32>
    %cst_59 = arith.constant dense<0.000000e+00> : vector<16xf32>
    %116 = vector.multi_reduction <add>, %115, %cst_59 [1] : vector<16x128xf32> to vector<16xf32>
    %117 = vector.shape_cast %116 : vector<16xf32> to vector<16x1xf32>
    %cst_60 = arith.constant 1.280000e+02 : f32
    %118 = vector.broadcast %cst_60 : f32 to vector<16x1xf32>
    %119 = arith.divf %117, %118 : vector<16x1xf32>
    %120 = vector.broadcast %110 : vector<16x1xf32> to vector<16x128xf32>
    %121 = arith.subf %102, %120 : vector<16x128xf32>
    %cst_61 = arith.constant 9.99999974E-6 : f32
    %122 = vector.broadcast %cst_61 : f32 to vector<16x1xf32>
    %123 = arith.addf %119, %122 : vector<16x1xf32>
    %124 = math.rsqrt %123 : vector<16x1xf32>
    %125 = vector.broadcast %124 : vector<16x1xf32> to vector<16x128xf32>
    %126 = arith.mulf %121, %125 : vector<16x128xf32>
    %127 = vector.broadcast %104 : vector<1x128xf32> to vector<16x128xf32>
    %128 = arith.mulf %126, %127 : vector<16x128xf32>
    %129 = vector.broadcast %106 : vector<1x128xf32> to vector<16x128xf32>
    %130 = arith.addf %128, %129 : vector<16x128xf32>
    %c0_62 = arith.constant 0 : index
    %c0_63 = arith.constant 0 : index
    %131 = vector.load %arg20[%c0_62, %c0_63] : memref<16x128xf32, #tpu.memory_space<vmem>>, vector<16x128xf32>
    tpu.vector_store %arg20[%c0_62, %c0_63], %130 {strides = array<i32>} : memref<16x128xf32, #tpu.memory_space<vmem>>, vector<16x128xf32>,
    %c3_i32 = arith.constant 3 : i32
    %132 = arith.cmpi eq, %arg1, %c3_i32 : i32
    %133 = arith.extui %132 : i1 to i32
    %c0_i32_64 = arith.constant 0 : i32
    %134 = arith.cmpi ne, %133, %c0_i32_64 : i32
    scf.if %134 {
      %135 = arith.truncf %130 : vector<16x128xf32> to vector<16x128xbf16>
      %c0_65 = arith.constant 0 : index
      %c0_66 = arith.constant 0 : index
      %136 = vector.load %arg17[%c0_65, %c0_66] : memref<128x128xbf16, #tpu.memory_space<vmem>>, vector<128x128xbf16>
      %cst_67 = arith.constant dense<0.000000e+00> : vector<16x128xf32>
      %137 = tpu.matmul %135, %136, %cst_67 {dimension_numbers = #tpu.dot_dimension_numbers<[1], [0], [0], [1], [0, 0, 1, 1], [], []>} : vector<16x128xbf16>, vector<128x128xbf16>, vector<16x128xf32> -> vector<16x128xf32>
      %c0_68 = arith.constant 0 : index
      %c0_69 = arith.constant 0 : index
      %138 = vector.load %arg18[%c0_68, %c0_69] : memref<1x128xf32, #tpu.memory_space<vmem>>, vector<1x128xf32>
      %139 = vector.broadcast %138 : vector<1x128xf32> to vector<16x128xf32>
      %140 = arith.addf %137, %139 : vector<16x128xf32>
      %c0_70 = arith.constant 0 : index
      %c0_71 = arith.constant 0 : index
      %141 = vector.load %arg19[%c0_70, %c0_71] : memref<16x128xf32, #tpu.memory_space<vmem>>, vector<16x128xf32>
      tpu.vector_store %arg19[%c0_70, %c0_71], %140 {strides = array<i32>} : memref<16x128xf32, #tpu.memory_space<vmem>>, vector<16x128xf32>,
    } else {
    }
    return
  }
  func.func @transform_0(%arg0: i32, %arg1: i32) -> (i32, i32) {
    %c0_i32 = arith.constant 0 : i32
    %c0_i32_0 = arith.constant 0 : i32
    return %arg0, %c0_i32 : i32, i32
  }
  func.func @transform_1(%arg0: i32, %arg1: i32) -> (i32, i32) {
    %c0_i32 = arith.constant 0 : i32
    %c0_i32_0 = arith.constant 0 : i32
    %c0_i32_1 = arith.constant 0 : i32
    return %c0_i32, %c0_i32_0 : i32, i32
  }
  func.func @transform_2(%arg0: i32, %arg1: i32) -> (i32, i32, i32) {
    %c0_i32 = arith.constant 0 : i32
    %c0_i32_0 = arith.constant 0 : i32
    %c0_i32_1 = arith.constant 0 : i32
    %c0_i32_2 = arith.constant 0 : i32
    return %c0_i32, %c0_i32_0, %c0_i32_1 : i32, i32, i32
  }
  func.func @transform_3(%arg0: i32, %arg1: i32) -> (i32, i32, i32) {
    %c0_i32 = arith.constant 0 : i32
    %c0_i32_0 = arith.constant 0 : i32
    %c0_i32_1 = arith.constant 0 : i32
    return %arg1, %c0_i32, %c0_i32_0 : i32, i32, i32
  }
  func.func @transform_4(%arg0: i32, %arg1: i32) -> (i32, i32, i32) {
    %c0_i32 = arith.constant 0 : i32
    %c0_i32_0 = arith.constant 0 : i32
    %c0_i32_1 = arith.constant 0 : i32
    return %arg1, %c0_i32, %c0_i32_0 : i32, i32, i32
  }
  func.func @transform_5(%arg0: i32, %arg1: i32) -> (i32, i32, i32) {
    %c0_i32 = arith.constant 0 : i32
    %c0_i32_0 = arith.constant 0 : i32
    %c0_i32_1 = arith.constant 0 : i32
    return %arg1, %c0_i32, %c0_i32_0 : i32, i32, i32
  }
  func.func @transform_6(%arg0: i32, %arg1: i32) -> (i32, i32, i32) {
    %c0_i32 = arith.constant 0 : i32
    %c0_i32_0 = arith.constant 0 : i32
    %c0_i32_1 = arith.constant 0 : i32
    return %arg1, %c0_i32, %c0_i32_0 : i32, i32, i32
  }
  func.func @transform_7(%arg0: i32, %arg1: i32) -> (i32, i32, i32) {
    %c0_i32 = arith.constant 0 : i32
    %c0_i32_0 = arith.constant 0 : i32
    %c0_i32_1 = arith.constant 0 : i32
    return %arg1, %c0_i32, %c0_i32_0 : i32, i32, i32
  }
  func.func @transform_8(%arg0: i32, %arg1: i32) -> (i32, i32, i32) {
    %c0_i32 = arith.constant 0 : i32
    %c0_i32_0 = arith.constant 0 : i32
    %c0_i32_1 = arith.constant 0 : i32
    return %arg1, %c0_i32, %c0_i32_0 : i32, i32, i32
  }
  func.func @transform_9(%arg0: i32, %arg1: i32) -> (i32, i32, i32) {
    %c0_i32 = arith.constant 0 : i32
    %c0_i32_0 = arith.constant 0 : i32
    %c0_i32_1 = arith.constant 0 : i32
    return %arg1, %c0_i32, %c0_i32_0 : i32, i32, i32
  }
  func.func @transform_10(%arg0: i32, %arg1: i32) -> (i32, i32, i32) {
    %c0_i32 = arith.constant 0 : i32
    %c0_i32_0 = arith.constant 0 : i32
    %c0_i32_1 = arith.constant 0 : i32
    return %arg1, %c0_i32, %c0_i32_0 : i32, i32, i32
  }
  func.func @transform_11(%arg0: i32, %arg1: i32) -> (i32, i32, i32) {
    %c0_i32 = arith.constant 0 : i32
    %c0_i32_0 = arith.constant 0 : i32
    %c0_i32_1 = arith.constant 0 : i32
    return %arg1, %c0_i32, %c0_i32_0 : i32, i32, i32
  }
  func.func @transform_12(%arg0: i32, %arg1: i32) -> (i32, i32, i32) {
    %c0_i32 = arith.constant 0 : i32
    %c0_i32_0 = arith.constant 0 : i32
    %c0_i32_1 = arith.constant 0 : i32
    return %arg1, %c0_i32, %c0_i32_0 : i32, i32, i32
  }
  func.func @transform_13(%arg0: i32, %arg1: i32) -> (i32, i32, i32) {
    %c0_i32 = arith.constant 0 : i32
    %c0_i32_0 = arith.constant 0 : i32
    %c0_i32_1 = arith.constant 0 : i32
    return %arg1, %c0_i32, %c0_i32_0 : i32, i32, i32
  }
  func.func @transform_14(%arg0: i32, %arg1: i32) -> (i32, i32, i32) {
    %c0_i32 = arith.constant 0 : i32
    %c0_i32_0 = arith.constant 0 : i32
    %c0_i32_1 = arith.constant 0 : i32
    return %arg1, %c0_i32, %c0_i32_0 : i32, i32, i32
  }
  func.func @transform_15(%arg0: i32, %arg1: i32) -> (i32, i32) {
    %c0_i32 = arith.constant 0 : i32
    %c0_i32_0 = arith.constant 0 : i32
    %c0_i32_1 = arith.constant 0 : i32
    return %c0_i32, %c0_i32_0 : i32, i32
  }
  func.func @transform_16(%arg0: i32, %arg1: i32) -> (i32, i32) {
    %c0_i32 = arith.constant 0 : i32
    %c0_i32_0 = arith.constant 0 : i32
    %c0_i32_1 = arith.constant 0 : i32
    return %c0_i32, %c0_i32_0 : i32, i32
  }
  func.func @transform_17(%arg0: i32, %arg1: i32) -> (i32, i32) {
    %c0_i32 = arith.constant 0 : i32
    %c0_i32_0 = arith.constant 0 : i32
    return %arg0, %c0_i32 : i32, i32
  }
}

</mosaic_0001>

<llo_original>
// kernel: jarvis_forward.1
$region0: #{jarvis_forward.1}
  #allocation0 [shape = 'u32[]', space=smem, size = 0x4, offset = 0x4, fixed_abs, tag = 'smem constant byte address 0x4 - core index']
  #allocation1 [shape = 'u32[144,128]{1,0:T(1,128)}', space=vmem, size = 0x12000, scoped, tag = 'internal scratch']
  #allocation2 [shape = 'f32[16,128]{1,0:T(8,128)}', space=vmem, size = 0x2000, scoped, tag = 'scratch operand']
  %s0 = inlined_call_operand.vmem [shape: f32[16,128], index: 0, kind: input, shape index: {}]
  %s1 = inlined_call_operand.vmem [shape: f32[16,16], index: 1, kind: input, shape index: {}]
  %s2 = inlined_call_operand.vmem [shape: f32[4,1,128], index: 2, kind: input, shape index: {}]
  %s3 = inlined_call_operand.hbm [shape: bf16[4,128,384], index: 3, kind: input, shape index: {}]
  %s4 = inlined_call_operand.vmem [shape: f32[4,1,384], index: 4, kind: input, shape index: {}]
  %s5 = inlined_call_operand.vmem [shape: bf16[4,128,128], index: 5, kind: input, shape index: {}]
  %s6 = inlined_call_operand.vmem [shape: f32[4,1,128], index: 6, kind: input, shape index: {}]
  %s7 = inlined_call_operand.vmem [shape: f32[4,1,128], index: 7, kind: input, shape index: {}]
  %s8 = inlined_call_operand.vmem [shape: f32[4,1,128], index: 8, kind: input, shape index: {}]
  %s9 = inlined_call_operand.hbm [shape: bf16[4,128,512], index: 9, kind: input, shape index: {}]
  %s10 = inlined_call_operand.vmem [shape: f32[4,1,512], index: 10, kind: input, shape index: {}]
  %s11 = inlined_call_operand.hbm [shape: bf16[4,512,128], index: 11, kind: input, shape index: {}]
  %s12 = inlined_call_operand.vmem [shape: f32[4,1,128], index: 12, kind: input, shape index: {}]
  %s13 = inlined_call_operand.hbm [shape: f32[4,1,128], index: 13, kind: input, shape index: {}]
  %s14 = inlined_call_operand.hbm [shape: f32[4,1,128], index: 14, kind: input, shape index: {}]
  %s15 = inlined_call_operand.hbm [shape: bf16[128,128], index: 15, kind: input, shape index: {}]
  %s16 = inlined_call_operand.hbm [shape: f32[1,128], index: 16, kind: input, shape index: {}]
  %s17 = inlined_call_operand.hbm [shape: f32[16,128], index: 17, kind: output, shape index: {}]
  %s18 = sld [smem:[#allocation0]]
  $region137: #{jarvis_forward.1} parent=0
    _
  %s20 = ssub.s32 1, %s18
  %s21 = scalar_select 0, %s20, %s18
  $region1: #{jarvis_forward.1} parent=0
    #allocation3 [shape = 'u8[196608]{0}', space=vmem, size = 0x30000, scoped, tag = 'input window, operand 3']
    #allocation4 [shape = 's32[2]{0}', space=sflag, size = 0x8, scoped, tag = 'scoped memory for jarvis_forward.1']
    #allocation5 [shape = 's32[2]{0}', space=sflag, size = 0x8, scoped, tag = 'scoped memory for jarvis_forward.1']
    #allocation6 [shape = 'u8[262144]{0}', space=vmem, size = 0x40000, scoped, tag = 'input window, operand 9']
    #allocation7 [shape = 's32[2]{0}', space=sflag, size = 0x8, scoped, tag = 'scoped memory for jarvis_forward.1']
    #allocation8 [shape = 'u8[262144]{0}', space=vmem, size = 0x40000, scoped, tag = 'input window, operand 11']
    #allocation9 [shape = 'u8[1024]{0}', space=vmem, size = 0x400, scoped, tag = 'input window, operand 13']
    #allocation10 [shape = 's32[2]{0}', space=sflag, size = 0x8, scoped, tag = 'scoped memory for jarvis_forward.1']
    #allocation11 [shape = 'u8[1024]{0}', space=vmem, size = 0x400, scoped, tag = 'input window, operand 14']
    #allocation12 [shape = 'u8[32768]{0}', space=vmem, size = 0x8000, scoped, tag = 'input window, operand 15, single buffered']
    #allocation13 [shape = 's32[1]{0}', space=sflag, size = 0x4, scoped, tag = 'scoped memory for jarvis_forward.1']
    #allocation14 [shape = 'u8[512]{0}', space=vmem, size = 0x400, scoped, tag = 'input window, operand 16, single buffered']
    #allocation15 [shape = 'u8[8192]{0}', space=vmem, size = 0x2000, scoped, tag = 'output window, operand 0, single buffered']
    %22 = vsyncpa [#allocation4], 0
    %s23 = scalar_lea.sflag [#allocation4], 1
    %24 = vsyncpa %s23, 0
    %25 = vsyncpa [#allocation7], 0
    %s26 = scalar_lea.sflag [#allocation7], 1
    %27 = vsyncpa %s26, 0
    %28 = vsyncpa [#allocation10], 0
    %s29 = scalar_lea.sflag [#allocation10], 1
    %30 = vsyncpa %s29, 0
    %31 = vsyncpa [#allocation13], 0
    %32 = vsyncpa [#allocation5], 0
    loop: start=0, step=1, limit=6
    $region2: #{jarvis_forward.1} parent=1 // loop_pre_header
      _
    $region3: #{jarvis_forward.1} parent=1 // loop_header
      %s34 = sphi 0, %s38
      %p35 = scmp.ge.s32.totalorder %s34, 6
      %s41 = sphi 0, %s53
      %s42 = sphi 0, %s49
      %s43 = sphi 0, %s41
      %s44 = sphi 0, %s42
      %s45 = sphi 0, %s43
      %s46 = sphi 0, %s44
      %s56 = sphi 0, %s58
      %s59 = sphi 0, %s56
      %s60 = sphi 0, %s59
      %s76 = sphi 0, %s60
      %s80 = sphi 0, %s80
      %s82 = sphi 0, %s80
      %s83 = sphi 0, %s82
      %s97 = sphi 0, %s83
      %s101 = sphi 0, %s101
      %s103 = sphi 0, %s101
      %s104 = sphi 0, %s103
      %s118 = sphi 0, %s104
      %s124 = sphi 0, %s126
      %s127 = sphi 0, %s124
      %s128 = sphi 0, %s127
      %s144 = sphi 0, %s128
      %s150 = sphi 0, %s152
      %s153 = sphi 0, %s150
      %s154 = sphi 0, %s153
      %s170 = sphi 0, %s154
      %s176 = sphi 0, %s178
      %s179 = sphi 0, %s176
      %s180 = sphi 0, %s179
      %s196 = sphi 0, %s180
      %s202 = sphi 0, %s204
      %s205 = sphi 0, %s202
      %s206 = sphi 0, %s205
      %s222 = sphi 0, %s206
      %s228 = sphi 0, %s230
      %s231 = sphi 0, %s228
      %s232 = sphi 0, %s231
      %s248 = sphi 0, %s232
      %s254 = sphi 0, %s256
      %s257 = sphi 0, %s254
      %s258 = sphi 0, %s257
      %s274 = sphi 0, %s258
      %s280 = sphi 0, %s282
      %s283 = sphi 0, %s280
      %s284 = sphi 0, %s283
      %s300 = sphi 0, %s284
      %s306 = sphi 0, %s308
      %s309 = sphi 0, %s306
      %s310 = sphi 0, %s309
      %s326 = sphi 0, %s310
      %s332 = sphi 0, %s334
      %s335 = sphi 0, %s332
      %s336 = sphi 0, %s335
      %s352 = sphi 0, %s336
      %s358 = sphi 0, %s360
      %s361 = sphi 0, %s358
      %s362 = sphi 0, %s361
      %s378 = sphi 0, %s362
      %s384 = sphi 0, %s386
      %s387 = sphi 0, %s384
      %s388 = sphi 0, %s387
      %s404 = sphi 0, %s388
      %s410 = sphi 0, %s412
      %s413 = sphi 0, %s410
      %s414 = sphi 0, %s413
      %s430 = sphi 0, %s414
      %s434 = sphi 0, %s434
      %s436 = sphi 0, %s434
      %s437 = sphi 0, %s436
      %s451 = sphi 0, %s437
      %s455 = sphi 0, %s455
      %s457 = sphi 0, %s455
      %s458 = sphi 0, %s457
      %s472 = sphi 0, %s458
      %s478 = sphi 0, %s480
      %s481 = sphi 0, %s478
      %s482 = sphi 0, %s481
      %s498 = sphi 0, %s482
    $region4: #{jarvis_forward.1} parent=1 // loop_header_branch
      %37 = sbr.rel (%p35) target = $region8
    $region5: #{jarvis_forward.1} parent=1 // loop_body
      %s39 = ssub.s32 %s34, 1
      %s40 = ssub.s32 %s34, 2
      %s47 = sadd.s32 1, %s42
      %p48 = scmp.ge.s32.totalorder %s47, 4
      %s49 = scalar_select %p48, 0, %s47
      %s50 = sadd.s32 1, %s41
      %s51 = scalar_select %p48, %s50, %s41
      %p52 = scmp.ge.s32.totalorder %s51, 1
      %s53 = scalar_select %p52, 0, %s51
      %s54 = ssub.s32 %s41, %s53
      %p55 = scmp.eq.s32.totalorder %s54, 0
      %s57 = sadd.s32 %s56, 1
      %s58 = scalar_select %p55, %s56, %s57
      %p61 = pneg %p55
      %p62 = scmp.eq.s32.totalorder %s34, 3
      %p63 = por %p61, %p62
      %p64 = scmp.ne.s32.totalorder %s56, %s59
      %p65 = scmp.eq.s32.totalorder %s34, 0
      %p66 = por %p64, %p65
      %p67 = scmp.ne.s32.totalorder %s56, %s59
      %p68 = scmp.eq.s32.totalorder %s39, 3
      %p69 = por %p67, %p68
      %p70 = scmp.ne.s32.totalorder %s59, %s60
      %p71 = scmp.eq.s32.totalorder %s39, 0
      %p72 = por %p70, %p71
      %p73 = scmp.ne.s32.totalorder %s59, %s60
      %p74 = scmp.eq.s32.totalorder %s40, 3
      %p75 = por %p73, %p74
      %p77 = scmp.ne.s32.totalorder %s60, %s76
      %p78 = scmp.eq.s32.totalorder %s40, 0
      %p79 = por %p77, %p78
      %s81 = sadd.s32 %s80, 1
      %p84 = scmp.eq.s32.totalorder %s34, 3
      %p85 = scmp.ne.s32.totalorder %s80, %s82
      %p86 = scmp.eq.s32.totalorder %s34, 0
      %p87 = por %p85, %p86
      %p88 = scmp.ne.s32.totalorder %s80, %s82
      %p89 = scmp.eq.s32.totalorder %s39, 3
      %p90 = por %p88, %p89
      %p91 = scmp.ne.s32.totalorder %s82, %s83
      %p92 = scmp.eq.s32.totalorder %s39, 0
      %p93 = por %p91, %p92
      %p94 = scmp.ne.s32.totalorder %s82, %s83
      %p95 = scmp.eq.s32.totalorder %s40, 3
      %p96 = por %p94, %p95
      %p98 = scmp.ne.s32.totalorder %s83, %s97
      %p99 = scmp.eq.s32.totalorder %s40, 0
      %p100 = por %p98, %p99
      %s102 = sadd.s32 %s101, 1
      %p105 = scmp.eq.s32.totalorder %s34, 3
      %p106 = scmp.ne.s32.totalorder %s101, %s103
      %p107 = scmp.eq.s32.totalorder %s34, 0
      %p108 = por %p106, %p107
      %p109 = scmp.ne.s32.totalorder %s101, %s103
      %p110 = scmp.eq.s32.totalorder %s39, 3
      %p111 = por %p109, %p110
      %p112 = scmp.ne.s32.totalorder %s103, %s104
      %p113 = scmp.eq.s32.totalorder %s39, 0
      %p114 = por %p112, %p113
      %p115 = scmp.ne.s32.totalorder %s103, %s104
      %p116 = scmp.eq.s32.totalorder %s40, 3
      %p117 = por %p115, %p116
      %p119 = scmp.ne.s32.totalorder %s104, %s118
      %p120 = scmp.eq.s32.totalorder %s40, 0
      %p121 = por %p119, %p120
      %s122 = ssub.s32 %s42, %s49
      %p123 = scmp.eq.s32.totalorder %s122, 0
      %s125 = sadd.s32 %s124, 1
      %s126 = scalar_select %p123, %s124, %s125
      %p129 = pneg %p123
      %p130 = scmp.eq.s32.totalorder %s34, 3
      %p131 = por %p129, %p130
      %p132 = scmp.ne.s32.totalorder %s124, %s127
      %p133 = scmp.eq.s32.totalorder %s34, 0
      %p134 = por %p132, %p133
      %p135 = scmp.ne.s32.totalorder %s124, %s127
      %p136 = scmp.eq.s32.totalorder %s39, 3
      %p137 = por %p135, %p136
      %p138 = scmp.ne.s32.totalorder %s127, %s128
      %p139 = scmp.eq.s32.totalorder %s39, 0
      %p140 = por %p138, %p139
      %p141 = scmp.ne.s32.totalorder %s127, %s128
      %p142 = scmp.eq.s32.totalorder %s40, 3
      %p143 = por %p141, %p142
      %p145 = scmp.ne.s32.totalorder %s128, %s144
      %p146 = scmp.eq.s32.totalorder %s40, 0
      %p147 = por %p145, %p146
      %s148 = ssub.s32 %s42, %s49
      %p149 = scmp.eq.s32.totalorder %s148, 0
      %s151 = sadd.s32 %s150, 1
      %s152 = scalar_select %p149, %s150, %s151
      %p155 = pneg %p149
      %p156 = scmp.eq.s32.totalorder %s34, 3
      %p157 = por %p155, %p156
      %p158 = scmp.ne.s32.totalorder %s150, %s153
      %p159 = scmp.eq.s32.totalorder %s34, 0
      %p160 = por %p158, %p159
      %p161 = scmp.ne.s32.totalorder %s150, %s153
      %p162 = scmp.eq.s32.totalorder %s39, 3
      %p163 = por %p161, %p162
      %p164 = scmp.ne.s32.totalorder %s153, %s154
      %p165 = scmp.eq.s32.totalorder %s39, 0
      %p166 = por %p164, %p165
      %p167 = scmp.ne.s32.totalorder %s153, %s154
      %p168 = scmp.eq.s32.totalorder %s40, 3
      %p169 = por %p167, %p168
      %p171 = scmp.ne.s32.totalorder %s154, %s170
      %p172 = scmp.eq.s32.totalorder %s40, 0
      %p173 = por %p171, %p172
      %s174 = ssub.s32 %s42, %s49
      %p175 = scmp.eq.s32.totalorder %s174, 0
      %s177 = sadd.s32 %s176, 1
      %s178 = scalar_select %p175, %s176, %s177
      %p181 = pneg %p175
      %p182 = scmp.eq.s32.totalorder %s34, 3
      %p183 = por %p181, %p182
      %p184 = scmp.ne.s32.totalorder %s176, %s179
      %p185 = scmp.eq.s32.totalorder %s34, 0
      %p186 = por %p184, %p185
      %p187 = scmp.ne.s32.totalorder %s176, %s179
      %p188 = scmp.eq.s32.totalorder %s39, 3
      %p189 = por %p187, %p188
      %p190 = scmp.ne.s32.totalorder %s179, %s180
      %p191 = scmp.eq.s32.totalorder %s39, 0
      %p192 = por %p190, %p191
      %p193 = scmp.ne.s32.totalorder %s179, %s180
      %p194 = scmp.eq.s32.totalorder %s40, 3
      %p195 = por %p193, %p194
      %p197 = scmp.ne.s32.totalorder %s180, %s196
      %p198 = scmp.eq.s32.totalorder %s40, 0
      %p199 = por %p197, %p198
      %s200 = ssub.s32 %s42, %s49
      %p201 = scmp.eq.s32.totalorder %s200, 0
      %s203 = sadd.s32 %s202, 1
      %s204 = scalar_select %p201, %s202, %s203
      %p207 = pneg %p201
      %p208 = scmp.eq.s32.totalorder %s34, 3
      %p209 = por %p207, %p208
      %p210 = scmp.ne.s32.totalorder %s202, %s205
      %p211 = scmp.eq.s32.totalorder %s34, 0
      %p212 = por %p210, %p211
      %p213 = scmp.ne.s32.totalorder %s202, %s205
      %p214 = scmp.eq.s32.totalorder %s39, 3
      %p215 = por %p213, %p214
      %p216 = scmp.ne.s32.totalorder %s205, %s206
      %p217 = scmp.eq.s32.totalorder %s39, 0
      %p218 = por %p216, %p217
      %p219 = scmp.ne.s32.totalorder %s205, %s206
      %p220 = scmp.eq.s32.totalorder %s40, 3
      %p221 = por %p219, %p220
      %p223 = scmp.ne.s32.totalorder %s206, %s222
      %p224 = scmp.eq.s32.totalorder %s40, 0
      %p225 = por %p223, %p224
      %s226 = ssub.s32 %s42, %s49
      %p227 = scmp.eq.s32.totalorder %s226, 0
      %s229 = sadd.s32 %s228, 1
      %s230 = scalar_select %p227, %s228, %s229
      %p233 = pneg %p227
      %p234 = scmp.eq.s32.totalorder %s34, 3
      %p235 = por %p233, %p234
      %p236 = scmp.ne.s32.totalorder %s228, %s231
      %p237 = scmp.eq.s32.totalorder %s34, 0
      %p238 = por %p236, %p237
      %p239 = scmp.ne.s32.totalorder %s228, %s231
      %p240 = scmp.eq.s32.totalorder %s39, 3
      %p241 = por %p239, %p240
      %p242 = scmp.ne.s32.totalorder %s231, %s232
      %p243 = scmp.eq.s32.totalorder %s39, 0
      %p244 = por %p242, %p243
      %p245 = scmp.ne.s32.totalorder %s231, %s232
      %p246 = scmp.eq.s32.totalorder %s40, 3
      %p247 = por %p245, %p246
      %p249 = scmp.ne.s32.totalorder %s232, %s248
      %p250 = scmp.eq.s32.totalorder %s40, 0
      %p251 = por %p249, %p250
      %s252 = ssub.s32 %s42, %s49
      %p253 = scmp.eq.s32.totalorder %s252, 0
      %s255 = sadd.s32 %s254, 1
      %s256 = scalar_select %p253, %s254, %s255
      %p259 = pneg %p253
      %p260 = scmp.eq.s32.totalorder %s34, 3
      %p261 = por %p259, %p260
      %p262 = scmp.ne.s32.totalorder %s254, %s257
      %p263 = scmp.eq.s32.totalorder %s34, 0
      %p264 = por %p262, %p263
      %p265 = scmp.ne.s32.totalorder %s254, %s257
      %p266 = scmp.eq.s32.totalorder %s39, 3
      %p267 = por %p265, %p266
      %p268 = scmp.ne.s32.totalorder %s257, %s258
      %p269 = scmp.eq.s32.totalorder %s39, 0
      %p270 = por %p268, %p269
      %p271 = scmp.ne.s32.totalorder %s257, %s258
      %p272 = scmp.eq.s32.totalorder %s40, 3
      %p273 = por %p271, %p272
      %p275 = scmp.ne.s32.totalorder %s258, %s274
      %p276 = scmp.eq.s32.totalorder %s40, 0
      %p277 = por %p275, %p276
      %s278 = ssub.s32 %s42, %s49
      %p279 = scmp.eq.s32.totalorder %s278, 0
      %s281 = sadd.s32 %s280, 1
      %s282 = scalar_select %p279, %s280, %s281
      %p285 = pneg %p279
      %p286 = scmp.eq.s32.totalorder %s34, 3
      %p287 = por %p285, %p286
      %p288 = scmp.ne.s32.totalorder %s280, %s283
      %p289 = scmp.eq.s32.totalorder %s34, 0
      %p290 = por %p288, %p289
      %p291 = scmp.ne.s32.totalorder %s280, %s283
      %p292 = scmp.eq.s32.totalorder %s39, 3
      %p293 = por %p291, %p292
      %p294 = scmp.ne.s32.totalorder %s283, %s284
      %p295 = scmp.eq.s32.totalorder %s39, 0
      %p296 = por %p294, %p295
      %p297 = scmp.ne.s32.totalorder %s283, %s284
      %p298 = scmp.eq.s32.totalorder %s40, 3
      %p299 = por %p297, %p298
      %p301 = scmp.ne.s32.totalorder %s284, %s300
      %p302 = scmp.eq.s32.totalorder %s40, 0
      %p303 = por %p301, %p302
      %s304 = ssub.s32 %s42, %s49
      %p305 = scmp.eq.s32.totalorder %s304, 0
      %s307 = sadd.s32 %s306, 1
      %s308 = scalar_select %p305, %s306, %s307
      %p311 = pneg %p305
      %p312 = scmp.eq.s32.totalorder %s34, 3
      %p313 = por %p311, %p312
      %p314 = scmp.ne.s32.totalorder %s306, %s309
      %p315 = scmp.eq.s32.totalorder %s34, 0
      %p316 = por %p314, %p315
      %p317 = scmp.ne.s32.totalorder %s306, %s309
      %p318 = scmp.eq.s32.totalorder %s39, 3
      %p319 = por %p317, %p318
      %p320 = scmp.ne.s32.totalorder %s309, %s310
      %p321 = scmp.eq.s32.totalorder %s39, 0
      %p322 = por %p320, %p321
      %p323 = scmp.ne.s32.totalorder %s309, %s310
      %p324 = scmp.eq.s32.totalorder %s40, 3
      %p325 = por %p323, %p324
      %p327 = scmp.ne.s32.totalorder %s310, %s326
      %p328 = scmp.eq.s32.totalorder %s40, 0
      %p329 = por %p327, %p328
      %s330 = ssub.s32 %s42, %s49
      %p331 = scmp.eq.s32.totalorder %s330, 0
      %s333 = sadd.s32 %s332, 1
      %s334 = scalar_select %p331, %s332, %s333
      %p337 = pneg %p331
      %p338 = scmp.eq.s32.totalorder %s34, 3
      %p339 = por %p337, %p338
      %p340 = scmp.ne.s32.totalorder %s332, %s335
      %p341 = scmp.eq.s32.totalorder %s34, 0
      %p342 = por %p340, %p341
      %p343 = scmp.ne.s32.totalorder %s332, %s335
      %p344 = scmp.eq.s32.totalorder %s39, 3
      %p345 = por %p343, %p344
      %p346 = scmp.ne.s32.totalorder %s335, %s336
      %p347 = scmp.eq.s32.totalorder %s39, 0
      %p348 = por %p346, %p347
      %p349 = scmp.ne.s32.totalorder %s335, %s336
      %p350 = scmp.eq.s32.totalorder %s40, 3
      %p351 = por %p349, %p350
      %p353 = scmp.ne.s32.totalorder %s336, %s352
      %p354 = scmp.eq.s32.totalorder %s40, 0
      %p355 = por %p353, %p354
      %s356 = ssub.s32 %s42, %s49
      %p357 = scmp.eq.s32.totalorder %s356, 0
      %s359 = sadd.s32 %s358, 1
      %s360 = scalar_select %p357, %s358, %s359
      %p363 = pneg %p357
      %p364 = scmp.eq.s32.totalorder %s34, 3
      %p365 = por %p363, %p364
      %p366 = scmp.ne.s32.totalorder %s358, %s361
      %p367 = scmp.eq.s32.totalorder %s34, 0
      %p368 = por %p366, %p367
      %p369 = scmp.ne.s32.totalorder %s358, %s361
      %p370 = scmp.eq.s32.totalorder %s39, 3
      %p371 = por %p369, %p370
      %p372 = scmp.ne.s32.totalorder %s361, %s362
      %p373 = scmp.eq.s32.totalorder %s39, 0
      %p374 = por %p372, %p373
      %p375 = scmp.ne.s32.totalorder %s361, %s362
      %p376 = scmp.eq.s32.totalorder %s40, 3
      %p377 = por %p375, %p376
      %p379 = scmp.ne.s32.totalorder %s362, %s378
      %p380 = scmp.eq.s32.totalorder %s40, 0
      %p381 = por %p379, %p380
      %s382 = ssub.s32 %s42, %s49
      %p383 = scmp.eq.s32.totalorder %s382, 0
      %s385 = sadd.s32 %s384, 1
      %s386 = scalar_select %p383, %s384, %s385
      %p389 = pneg %p383
      %p390 = scmp.eq.s32.totalorder %s34, 3
      %p391 = por %p389, %p390
      %p392 = scmp.ne.s32.totalorder %s384, %s387
      %p393 = scmp.eq.s32.totalorder %s34, 0
      %p394 = por %p392, %p393
      %p395 = scmp.ne.s32.totalorder %s384, %s387
      %p396 = scmp.eq.s32.totalorder %s39, 3
      %p397 = por %p395, %p396
      %p398 = scmp.ne.s32.totalorder %s387, %s388
      %p399 = scmp.eq.s32.totalorder %s39, 0
      %p400 = por %p398, %p399
      %p401 = scmp.ne.s32.totalorder %s387, %s388
      %p402 = scmp.eq.s32.totalorder %s40, 3
      %p403 = por %p401, %p402
      %p405 = scmp.ne.s32.totalorder %s388, %s404
      %p406 = scmp.eq.s32.totalorder %s40, 0
      %p407 = por %p405, %p406
      %s408 = ssub.s32 %s42, %s49
      %p409 = scmp.eq.s32.totalorder %s408, 0
      %s411 = sadd.s32 %s410, 1
      %s412 = scalar_select %p409, %s410, %s411
      %p415 = pneg %p409
      %p416 = scmp.eq.s32.totalorder %s34, 3
      %p417 = por %p415, %p416
      %p418 = scmp.ne.s32.totalorder %s410, %s413
      %p419 = scmp.eq.s32.totalorder %s34, 0
      %p420 = por %p418, %p419
      %p421 = scmp.ne.s32.totalorder %s410, %s413
      %p422 = scmp.eq.s32.totalorder %s39, 3
      %p423 = por %p421, %p422
      %p424 = scmp.ne.s32.totalorder %s413, %s414
      %p425 = scmp.eq.s32.totalorder %s39, 0
      %p426 = por %p424, %p425
      %p427 = scmp.ne.s32.totalorder %s413, %s414
      %p428 = scmp.eq.s32.totalorder %s40, 3
      %p429 = por %p427, %p428
      %p431 = scmp.ne.s32.totalorder %s414, %s430
      %p432 = scmp.eq.s32.totalorder %s40, 0
      %p433 = por %p431, %p432
      %s435 = sadd.s32 %s434, 1
      %p438 = scmp.eq.s32.totalorder %s34, 3
      %p439 = scmp.ne.s32.totalorder %s434, %s436
      %p440 = scmp.eq.s32.totalorder %s34, 0
      %p441 = por %p439, %p440
      %p442 = scmp.ne.s32.totalorder %s434, %s436
      %p443 = scmp.eq.s32.totalorder %s39, 3
      %p444 = por %p442, %p443
      %p445 = scmp.ne.s32.totalorder %s436, %s437
      %p446 = scmp.eq.s32.totalorder %s39, 0
      %p447 = por %p445, %p446
      %p448 = scmp.ne.s32.totalorder %s436, %s437
      %p449 = scmp.eq.s32.totalorder %s40, 3
      %p450 = por %p448, %p449
      %p452 = scmp.ne.s32.totalorder %s437, %s451
      %p453 = scmp.eq.s32.totalorder %s40, 0
      %p454 = por %p452, %p453
      %s456 = sadd.s32 %s455, 1
      %p459 = scmp.eq.s32.totalorder %s34, 3
      %p460 = scmp.ne.s32.totalorder %s455, %s457
      %p461 = scmp.eq.s32.totalorder %s34, 0
      %p462 = por %p460, %p461
      %p463 = scmp.ne.s32.totalorder %s455, %s457
      %p464 = scmp.eq.s32.totalorder %s39, 3
      %p465 = por %p463, %p464
      %p466 = scmp.ne.s32.totalorder %s457, %s458
      %p467 = scmp.eq.s32.totalorder %s39, 0
      %p468 = por %p466, %p467
      %p469 = scmp.ne.s32.totalorder %s457, %s458
      %p470 = scmp.eq.s32.totalorder %s40, 3
      %p471 = por %p469, %p470
      %p473 = scmp.ne.s32.totalorder %s458, %s472
      %p474 = scmp.eq.s32.totalorder %s40, 0
      %p475 = por %p473, %p474
      %s476 = ssub.s32 %s41, %s53
      %p477 = scmp.eq.s32.totalorder %s476, 0
      %s479 = sadd.s32 %s478, 1
      %s480 = scalar_select %p477, %s478, %s479
      %p483 = pneg %p477
      %p484 = scmp.eq.s32.totalorder %s34, 3
      %p485 = por %p483, %p484
      %p486 = scmp.ne.s32.totalorder %s478, %s481
      %p487 = scmp.eq.s32.totalorder %s34, 0
      %p488 = por %p486, %p487
      %p489 = scmp.ne.s32.totalorder %s478, %s481
      %p490 = scmp.eq.s32.totalorder %s39, 3
      %p491 = por %p489, %p490
      %p492 = scmp.ne.s32.totalorder %s481, %s482
      %p493 = scmp.eq.s32.totalorder %s39, 0
      %p494 = por %p492, %p493
      %p495 = scmp.ne.s32.totalorder %s481, %s482
      %p496 = scmp.eq.s32.totalorder %s40, 3
      %p497 = por %p495, %p496
      %p499 = scmp.ne.s32.totalorder %s482, %s498
      %p500 = scmp.eq.s32.totalorder %s40, 0
      %p501 = por %p499, %p500
      %p502 = scmp.le.s32.totalorder 1, %s34
      %p503 = scmp.lt.s32.totalorder %s34, 5
      %p504 = pnand %p502, %p503
      %p505 = pneg %p504
      // Predicated region
      $region9: #{jarvis_forward.1} parent=5 // pred_check
        _
      $region10: #{jarvis_forward.1} parent=5 // pred_check_branch
        %507 = sbr.rel (%p504) target = $region12
      $region11: #{jarvis_forward.1} parent=5 // pred_region
        %s508 = ssub.s32 %s34, 1
        // Predicated region
        $region13: #{jarvis_forward.1} parent=11 // pred_check
          %p509 = pneg %p72
        $region14: #{jarvis_forward.1} parent=11 // pred_check_branch
          %511 = sbr.rel (%p509) target = $region16
        $region15: #{jarvis_forward.1} parent=11 // pred_region
          %s512 = smul.u32 2, %s43
          %p513 = scmp.lt.s32.totalorder %s512, 1
          %s514 = scalar_select %p513, %s512, 1
          %s515 = smul.addr %s514, 8
          %s516 = scalar_lea.vmem %s0, %s515
          %s517 = smul.u32 2, %s43
        $region16: #{jarvis_forward.1} parent=11 // pred_fallthru
          _
        // Predicated region
        $region17: #{jarvis_forward.1} parent=11 // pred_check
          %p518 = pneg %p93
        $region18: #{jarvis_forward.1} parent=11 // pred_check_branch
          %520 = sbr.rel (%p518) target = $region20
        $region19: #{jarvis_forward.1} parent=11 // pred_region
          _
        $region20: #{jarvis_forward.1} parent=11 // pred_fallthru
          _
        // Predicated region
        $region21: #{jarvis_forward.1} parent=11 // pred_check
          %p521 = pneg %p114
        $region22: #{jarvis_forward.1} parent=11 // pred_check_branch
          %523 = sbr.rel (%p521) target = $region24
        $region23: #{jarvis_forward.1} parent=11 // pred_region
          _
        $region24: #{jarvis_forward.1} parent=11 // pred_fallthru
          _
        // Predicated region
        $region25: #{jarvis_forward.1} parent=11 // pred_check
          %p524 = pneg %p447
        $region26: #{jarvis_forward.1} parent=11 // pred_check_branch
          %526 = sbr.rel (%p524) target = $region28
        $region27: #{jarvis_forward.1} parent=11 // pred_region
          %s528 = ssub.s32 1024, 1024
          %529 = vsyncadd [#allocation13], %s528
          %s530 = sshll.u32 [#allocation12], 4
          %s531 = int_to_ptr.vmem [resolvable:$true] %s530
          %536 = dma.hbm_to_vmem [thread:$0]  %s15, 1024, %s531, [#allocation13], 64, 64, 4
        $region28: #{jarvis_forward.1} parent=11 // pred_fallthru
          _
        // Predicated region
        $region29: #{jarvis_forward.1} parent=11 // pred_check
          %p537 = pneg %p468
        $region30: #{jarvis_forward.1} parent=11 // pred_check_branch
          %539 = sbr.rel (%p537) target = $region32
        $region31: #{jarvis_forward.1} parent=11 // pred_region
          %s541 = ssub.s32 16, 16
          %542 = vsyncadd [#allocation13], %s541
          %s544 = sshll.u32 [#allocation14], 4
          %s545 = int_to_ptr.vmem [resolvable:$true] %s544
          %547 = dma.hbm_to_vmem [thread:$0]  %s16, 16, %s545, [#allocation13]
        $region32: #{jarvis_forward.1} parent=11 // pred_fallthru
          _
      $region12: #{jarvis_forward.1} parent=5 // pred_fallthru
        _
      %p548 = scmp.lt.s32.totalorder %s34, 4
      // Predicated region
      $region33: #{jarvis_forward.1} parent=5 // pred_check
        %p549 = pneg %p548
      $region34: #{jarvis_forward.1} parent=5 // pred_check_branch
        %551 = sbr.rel (%p549) target = $region36
      $region35: #{jarvis_forward.1} parent=5 // pred_region
        // Predicated region
        $region37: #{jarvis_forward.1} parent=35 // pred_check
          %p552 = pneg %p134
        $region38: #{jarvis_forward.1} parent=35 // pred_check_branch
          %554 = sbr.rel (%p552) target = $region40
        $region39: #{jarvis_forward.1} parent=35 // pred_region
          %s555 = sand.u32 %s124, 1
          %s556 = scalar_lea.sflag [#allocation4], %s555
          %s557 = sand.u32 %s124, 1
          %s558 = smul.addr %s557, 192
          %s559 = scalar_lea.vmem [#allocation3], %s558
          %s561 = ssub.s32 3072, 3072
          %562 = vsyncadd %s556, %s561
          %s563 = smul.addr %s42, 48
          %s564 = smul.addr %s563, 64
          %s565 = scalar_lea.hbm %s3, %s564
          %s566 = sshll.u32 %s559, 4
          %s567 = int_to_ptr.vmem [resolvable:$true] %s566
          %572 = dma.hbm_to_vmem [thread:$0]  %s565, 3072, %s567, %s556, 192, 192, 12
        $region40: #{jarvis_forward.1} parent=35 // pred_fallthru
          _
        // Predicated region
        $region41: #{jarvis_forward.1} parent=35 // pred_check
          %p573 = pneg %p160
        $region42: #{jarvis_forward.1} parent=35 // pred_check_branch
          %575 = sbr.rel (%p573) target = $region44
        $region43: #{jarvis_forward.1} parent=35 // pred_region
          %p576 = scmp.lt.s32.totalorder %s42, 3
          %s577 = scalar_select %p576, %s42, 3
          %s578 = smul.addr %s577, 3
          %s579 = scalar_lea.vmem %s4, %s578
        $region44: #{jarvis_forward.1} parent=35 // pred_fallthru
          _
        // Predicated region
        $region45: #{jarvis_forward.1} parent=35 // pred_check
          %p580 = pneg %p186
        $region46: #{jarvis_forward.1} parent=35 // pred_check_branch
          %582 = sbr.rel (%p580) target = $region48
        $region47: #{jarvis_forward.1} parent=35 // pred_region
          %p583 = scmp.lt.s32.totalorder %s42, 3
          %s584 = scalar_select %p583, %s42, 3
          %s585 = smul.addr %s584, 16
          %s586 = smul.addr %s585, 4
          %s587 = scalar_lea.vmem %s5, %s586
        $region48: #{jarvis_forward.1} parent=35 // pred_fallthru
          _
        // Predicated region
        $region49: #{jarvis_forward.1} parent=35 // pred_check
          %p588 = pneg %p212
        $region50: #{jarvis_forward.1} parent=35 // pred_check_branch
          %590 = sbr.rel (%p588) target = $region52
        $region51: #{jarvis_forward.1} parent=35 // pred_region
          %p591 = scmp.lt.s32.totalorder %s42, 3
          %s592 = scalar_select %p591, %s42, 3
          %s593 = scalar_lea.vmem %s6, %s592
        $region52: #{jarvis_forward.1} parent=35 // pred_fallthru
          _
        // Predicated region
        $region53: #{jarvis_forward.1} parent=35 // pred_check
          %p594 = pneg %p238
        $region54: #{jarvis_forward.1} parent=35 // pred_check_branch
          %596 = sbr.rel (%p594) target = $region56
        $region55: #{jarvis_forward.1} parent=35 // pred_region
          %p597 = scmp.lt.s32.totalorder %s42, 3
          %s598 = scalar_select %p597, %s42, 3
          %s599 = scalar_lea.vmem %s7, %s598
        $region56: #{jarvis_forward.1} parent=35 // pred_fallthru
          _
        // Predicated region
        $region57: #{jarvis_forward.1} parent=35 // pred_check
          %p600 = pneg %p264
        $region58: #{jarvis_forward.1} parent=35 // pred_check_branch
          %602 = sbr.rel (%p600) target = $region60
        $region59: #{jarvis_forward.1} parent=35 // pred_region
          %p603 = scmp.lt.s32.totalorder %s42, 3
          %s604 = scalar_select %p603, %s42, 3
          %s605 = scalar_lea.vmem %s8, %s604
        $region60: #{jarvis_forward.1} parent=35 // pred_fallthru
          _
        // Predicated region
        $region61: #{jarvis_forward.1} parent=35 // pred_check
          %p606 = pneg %p290
        $region62: #{jarvis_forward.1} parent=35 // pred_check_branch
          %608 = sbr.rel (%p606) target = $region64
        $region63: #{jarvis_forward.1} parent=35 // pred_region
          %s609 = sand.u32 %s34, 1
          %s610 = scalar_lea.sflag [#allocation7], %s609
          %s611 = sand.u32 %s280, 1
          %s612 = smul.addr %s611, 256
          %s613 = scalar_lea.vmem [#allocation6], %s612
          %s615 = ssub.s32 4096, 4096
          %616 = vsyncadd %s610, %s615
          %s617 = smul.addr %s42, 64
          %s618 = smul.addr %s617, 64
          %s619 = scalar_lea.hbm %s9, %s618
          %s620 = sshll.u32 %s613, 4
          %s621 = int_to_ptr.vmem [resolvable:$true] %s620
          %626 = dma.hbm_to_vmem [thread:$0]  %s619, 4096, %s621, %s610, 256, 256, 16
        $region64: #{jarvis_forward.1} parent=35 // pred_fallthru
          _
        // Predicated region
        $region65: #{jarvis_forward.1} parent=35 // pred_check
          %p627 = pneg %p316
        $region66: #{jarvis_forward.1} parent=35 // pred_check_branch
          %629 = sbr.rel (%p627) target = $region68
        $region67: #{jarvis_forward.1} parent=35 // pred_region
          %p630 = scmp.lt.s32.totalorder %s42, 3
          %s631 = scalar_select %p630, %s42, 3
          %s632 = smul.addr %s631, 4
          %s633 = scalar_lea.vmem %s10, %s632
        $region68: #{jarvis_forward.1} parent=35 // pred_fallthru
          _
        // Predicated region
        $region69: #{jarvis_forward.1} parent=35 // pred_check
          %p634 = pneg %p342
        $region70: #{jarvis_forward.1} parent=35 // pred_check_branch
          %636 = sbr.rel (%p634) target = $region72
        $region71: #{jarvis_forward.1} parent=35 // pred_region
          %s637 = sand.u32 %s34, 1
          %s638 = scalar_lea.sflag [#allocation7], %s637
          %s639 = sand.u32 %s332, 1
          %s640 = smul.addr %s639, 256
          %s641 = scalar_lea.vmem [#allocation8], %s640
          %s643 = ssub.s32 4096, 4096
          %644 = vsyncadd %s638, %s643
          %s645 = smul.addr %s42, 64
          %s646 = smul.addr %s645, 64
          %s647 = scalar_lea.hbm %s11, %s646
          %s648 = sshll.u32 %s641, 4
          %s649 = int_to_ptr.vmem [resolvable:$true] %s648
          %654 = dma.hbm_to_vmem [thread:$0]  %s647, 4096, %s649, %s638, 64, 64, 4
        $region72: #{jarvis_forward.1} parent=35 // pred_fallthru
          _
        // Predicated region
        $region73: #{jarvis_forward.1} parent=35 // pred_check
          %p655 = pneg %p368
        $region74: #{jarvis_forward.1} parent=35 // pred_check_branch
          %657 = sbr.rel (%p655) target = $region76
        $region75: #{jarvis_forward.1} parent=35 // pred_region
          %p658 = scmp.lt.s32.totalorder %s42, 3
          %s659 = scalar_select %p658, %s42, 3
          %s660 = scalar_lea.vmem %s12, %s659
        $region76: #{jarvis_forward.1} parent=35 // pred_fallthru
          _
        // Predicated region
        $region77: #{jarvis_forward.1} parent=35 // pred_check
          %p661 = pneg %p394
        $region78: #{jarvis_forward.1} parent=35 // pred_check_branch
          %663 = sbr.rel (%p661) target = $region80
        $region79: #{jarvis_forward.1} parent=35 // pred_region
          %s664 = sand.u32 %s34, 1
          %s665 = scalar_lea.sflag [#allocation10], %s664
          %s666 = sand.u32 %s384, 1
          %s667 = scalar_lea.vmem [#allocation9], %s666
          %s669 = ssub.s32 16, 16
          %670 = vsyncadd %s665, %s669
          %s671 = smul.addr %s42, 16
          %s672 = scalar_lea.hbm %s13, %s671
          %s674 = sshll.u32 %s667, 4
          %s675 = int_to_ptr.vmem [resolvable:$true] %s674
          %677 = dma.hbm_to_vmem [thread:$0]  %s672, 16, %s675, %s665
        $region80: #{jarvis_forward.1} parent=35 // pred_fallthru
          _
        // Predicated region
        $region81: #{jarvis_forward.1} parent=35 // pred_check
          %p678 = pneg %p420
        $region82: #{jarvis_forward.1} parent=35 // pred_check_branch
          %680 = sbr.rel (%p678) target = $region84
        $region83: #{jarvis_forward.1} parent=35 // pred_region
          %s681 = sand.u32 %s34, 1
          %s682 = scalar_lea.sflag [#allocation10], %s681
          %s683 = sand.u32 %s410, 1
          %s684 = scalar_lea.vmem [#allocation11], %s683
          %s686 = ssub.s32 16, 16
          %687 = vsyncadd %s682, %s686
          %s688 = smul.addr %s42, 16
          %s689 = scalar_lea.hbm %s14, %s688
          %s691 = sshll.u32 %s684, 4
          %s692 = int_to_ptr.vmem [resolvable:$true] %s691
          %694 = dma.hbm_to_vmem [thread:$0]  %s689, 16, %s692, %s682
        $region84: #{jarvis_forward.1} parent=35 // pred_fallthru
          _
      $region36: #{jarvis_forward.1} parent=5 // pred_fallthru
        _
      %p695 = scmp.le.s32.totalorder 1, %s34
      %p696 = scmp.lt.s32.totalorder %s34, 5
      %p697 = pnand %p695, %p696
      %p698 = pneg %p697
      // Predicated region
      $region85: #{jarvis_forward.1} parent=5 // pred_check
        _
      $region86: #{jarvis_forward.1} parent=5 // pred_check_branch
        %700 = sbr.rel (%p697) target = $region88
      $region87: #{jarvis_forward.1} parent=5 // pred_region
        %s701 = ssub.s32 %s34, 1
        %s702 = sand.u32 %s127, 1
        %s703 = scalar_lea.sflag [#allocation4], %s702
        %s704 = sand.u32 %s127, 1
        %s705 = smul.addr %s704, 192
        %s706 = scalar_lea.vmem [#allocation3], %s705
        // Predicated region
        $region89: #{jarvis_forward.1} parent=87 // pred_check
          %p707 = pneg %p140
        $region90: #{jarvis_forward.1} parent=87 // pred_check_branch
          %709 = sbr.rel (%p707) target = $region92
        $region91: #{jarvis_forward.1} parent=87 // pred_region
          %710 = dma.done %s703, 3072
        $region92: #{jarvis_forward.1} parent=87 // pred_fallthru
          _
        %s711 = sand.u32 %s39, 1
        %s712 = scalar_lea.sflag [#allocation7], %s711
        %s713 = sand.u32 %s283, 1
        %s714 = smul.addr %s713, 256
        %s715 = scalar_lea.vmem [#allocation6], %s714
        // Predicated region
        $region93: #{jarvis_forward.1} parent=87 // pred_check
          %p716 = pneg %p296
        $region94: #{jarvis_forward.1} parent=87 // pred_check_branch
          %718 = sbr.rel (%p716) target = $region96
        $region95: #{jarvis_forward.1} parent=87 // pred_region
          %719 = dma.done %s712, 4096
        $region96: #{jarvis_forward.1} parent=87 // pred_fallthru
          _
        %s720 = sand.u32 %s39, 1
        %s721 = scalar_lea.sflag [#allocation7], %s720
        %s722 = sand.u32 %s335, 1
        %s723 = smul.addr %s722, 256
        %s724 = scalar_lea.vmem [#allocation8], %s723
        // Predicated region
        $region97: #{jarvis_forward.1} parent=87 // pred_check
          %p725 = pneg %p348
        $region98: #{jarvis_forward.1} parent=87 // pred_check_branch
          %727 = sbr.rel (%p725) target = $region100
        $region99: #{jarvis_forward.1} parent=87 // pred_region
          %728 = dma.done %s721, 4096
        $region100: #{jarvis_forward.1} parent=87 // pred_fallthru
          _
        %s729 = sand.u32 %s39, 1
        %s730 = scalar_lea.sflag [#allocation10], %s729
        %s731 = sand.u32 %s387, 1
        %s732 = scalar_lea.vmem [#allocation9], %s731
        // Predicated region
        $region101: #{jarvis_forward.1} parent=87 // pred_check
          %p733 = pneg %p400
        $region102: #{jarvis_forward.1} parent=87 // pred_check_branch
          %735 = sbr.rel (%p733) target = $region104
        $region103: #{jarvis_forward.1} parent=87 // pred_region
          %736 = dma.done %s730, 16
        $region104: #{jarvis_forward.1} parent=87 // pred_fallthru
          _
        %s737 = sand.u32 %s39, 1
        %s738 = scalar_lea.sflag [#allocation10], %s737
        %s739 = sand.u32 %s413, 1
        %s740 = scalar_lea.vmem [#allocation11], %s739
        // Predicated region
        $region105: #{jarvis_forward.1} parent=87 // pred_check
          %p741 = pneg %p426
        $region106: #{jarvis_forward.1} parent=87 // pred_check_branch
          %743 = sbr.rel (%p741) target = $region108
        $region107: #{jarvis_forward.1} parent=87 // pred_region
          %744 = dma.done %s738, 16
        $region108: #{jarvis_forward.1} parent=87 // pred_fallthru
          _
        // Predicated region
        $region109: #{jarvis_forward.1} parent=87 // pred_check
          %p745 = pneg %p447
        $region110: #{jarvis_forward.1} parent=87 // pred_check_branch
          %747 = sbr.rel (%p745) target = $region112
        $region111: #{jarvis_forward.1} parent=87 // pred_region
          %748 = dma.done [#allocation13], 1024
        $region112: #{jarvis_forward.1} parent=87 // pred_fallthru
          _
        // Predicated region
        $region113: #{jarvis_forward.1} parent=87 // pred_check
          %p749 = pneg %p468
        $region114: #{jarvis_forward.1} parent=87 // pred_check_branch
          %751 = sbr.rel (%p749) target = $region116
        $region115: #{jarvis_forward.1} parent=87 // pred_region
          %752 = dma.done [#allocation13], 16
        $region116: #{jarvis_forward.1} parent=87 // pred_fallthru
          _
        %s753 = smul.u32 2, %s43
        %p754 = scmp.lt.s32.totalorder %s753, 1
        %s755 = scalar_select %p754, %s753, 1
        %s756 = smul.addr %s755, 8
        %s757 = scalar_lea.vmem %s0, %s756
        %p758 = pneg %p72
        %p759 = pneg %p69
        %p760 = pneg %p93
        %p761 = pneg %p90
        %p762 = pneg %p114
        %p763 = pneg %p111
        %s764 = sand.u32 %s127, 1
        %s765 = scalar_lea.sflag [#allocation4], %s764
        %s766 = sand.u32 %s127, 1
        %s767 = smul.addr %s766, 192
        %s768 = scalar_lea.vmem [#allocation3], %s767
        %p769 = pneg %p140
        %p770 = pneg %p137
        %p771 = scmp.lt.s32.totalorder %s44, 3
        %s772 = scalar_select %p771, %s44, 3
        %s773 = smul.addr %s772, 3
        %s774 = scalar_lea.vmem %s4, %s773
        %p775 = pneg %p166
        %p776 = pneg %p163
        %p777 = scmp.lt.s32.totalorder %s44, 3
        %s778 = scalar_select %p777, %s44, 3
        %s779 = smul.addr %s778, 16
        %s780 = smul.addr %s779, 4
        %s781 = scalar_lea.vmem %s5, %s780
        %p782 = pneg %p192
        %p783 = pneg %p189
        %p784 = scmp.lt.s32.totalorder %s44, 3
        %s785 = scalar_select %p784, %s44, 3
        %s786 = scalar_lea.vmem %s6, %s785
        %p787 = pneg %p218
        %p788 = pneg %p215
        %p789 = scmp.lt.s32.totalorder %s44, 3
        %s790 = scalar_select %p789, %s44, 3
        %s791 = scalar_lea.vmem %s7, %s790
        %p792 = pneg %p244
        %p793 = pneg %p241
        %p794 = scmp.lt.s32.totalorder %s44, 3
        %s795 = scalar_select %p794, %s44, 3
        %s796 = scalar_lea.vmem %s8, %s795
        %p797 = pneg %p270
        %p798 = pneg %p267
        %s799 = sand.u32 %s39, 1
        %s800 = scalar_lea.sflag [#allocation7], %s799
        %s801 = sand.u32 %s283, 1
        %s802 = smul.addr %s801, 256
        %s803 = scalar_lea.vmem [#allocation6], %s802
        %p804 = pneg %p296
        %p805 = pneg %p293
        %p806 = scmp.lt.s32.totalorder %s44, 3
        %s807 = scalar_select %p806, %s44, 3
        %s808 = smul.addr %s807, 4
        %s809 = scalar_lea.vmem %s10, %s808
        %p810 = pneg %p322
        %p811 = pneg %p319
        %s812 = sand.u32 %s39, 1
        %s813 = scalar_lea.sflag [#allocation7], %s812
        %s814 = sand.u32 %s335, 1
        %s815 = smul.addr %s814, 256
        %s816 = scalar_lea.vmem [#allocation8], %s815
        %p817 = pneg %p348
        %p818 = pneg %p345
        %p819 = scmp.lt.s32.totalorder %s44, 3
        %s820 = scalar_select %p819, %s44, 3
        %s821 = scalar_lea.vmem %s12, %s820
        %p822 = pneg %p374
        %p823 = pneg %p371
        %s824 = sand.u32 %s39, 1
        %s825 = scalar_lea.sflag [#allocation10], %s824
        %s826 = sand.u32 %s387, 1
        %s827 = scalar_lea.vmem [#allocation9], %s826
        %p828 = pneg %p400
        %p829 = pneg %p397
        %s830 = sand.u32 %s39, 1
        %s831 = scalar_lea.sflag [#allocation10], %s830
        %s832 = sand.u32 %s413, 1
        %s833 = scalar_lea.vmem [#allocation11], %s832
        %p834 = pneg %p426
        %p835 = pneg %p423
        %p836 = pneg %p447
        %p837 = pneg %p444
        %p838 = pneg %p468
        %p839 = pneg %p465
        %p840 = pneg %p494
        %p841 = pneg %p491
        %s842 = smul.u32 2, %s43
        %p843 = scmp.lt.s32.totalorder %s842, 1
        %s844 = scalar_select %p843, %s842, 1
        %s845 = smul.addr %s844, 8
        %s846 = scalar_lea.vmem %s0, %s845
        %s847 = smul.u32 2, %s43
        %p848 = scmp.lt.s32.totalorder %s44, 3
        %s849 = scalar_select %p848, %s44, 3
        %s850 = smul.addr %s849, 3
        %s851 = scalar_lea.vmem %s4, %s850
        %p852 = scmp.lt.s32.totalorder %s44, 3
        %s853 = scalar_select %p852, %s44, 3
        %s854 = smul.addr %s853, 16
        %s855 = smul.addr %s854, 4
        %s856 = scalar_lea.vmem %s5, %s855
        %p857 = scmp.lt.s32.totalorder %s44, 3
        %s858 = scalar_select %p857, %s44, 3
        %s859 = scalar_lea.vmem %s6, %s858
        %p860 = scmp.lt.s32.totalorder %s44, 3
        %s861 = scalar_select %p860, %s44, 3
        %s862 = scalar_lea.vmem %s7, %s861
        %p863 = scmp.lt.s32.totalorder %s44, 3
        %s864 = scalar_select %p863, %s44, 3
        %s865 = scalar_lea.vmem %s8, %s864
        %p866 = scmp.lt.s32.totalorder %s44, 3
        %s867 = scalar_select %p866, %s44, 3
        %s868 = smul.addr %s867, 4
        %s869 = scalar_lea.vmem %s10, %s868
        %p870 = scmp.lt.s32.totalorder %s44, 3
        %s871 = scalar_select %p870, %s44, 3
        %s872 = scalar_lea.vmem %s12, %s871
        %s873 = smul.u32 2, %s43
        %p875 = scmp.eq.s32.totalorder %s44, 0
        // Predicated region
        $region117: #{jarvis_forward.1} parent=87 // pred_check
          %p876 = pneg %p875
        $region118: #{jarvis_forward.1} parent=87 // pred_check_branch
          %878 = sbr.rel (%p876) target = $region120
        $region119: #{jarvis_forward.1} parent=87 // pred_region
          %v879 = vld [vmem:[%s846] sm:$0xff]
          %v880 = vld [vmem:[%s846 + $0x8] sm:$0xff]
          %881 = vst [vmem:[#allocation2] sm:$0xff] %v879
          %882 = vst [vmem:[#allocation2 + $0x8] sm:$0xff] %v880
        $region120: #{jarvis_forward.1} parent=87 // pred_fallthru
          _
        %v883 = vld [vmem:[#allocation2] sm:$0xff]
        %v884 = vld [vmem:[#allocation2 + $0x8] sm:$0xff]
        %v885 = vpack.c.bf16 %v884, %v883
        %v886 = vld [vmem:[%s706] sm:$0xff]
        %v887 = vld [vmem:[%s706 + $0x8] sm:$0xf]
        %v888 = vld [vmem:[%s706 + $0xc] sm:$0xff]
        %v889 = vld [vmem:[%s706 + $0x14] sm:$0xf]
        %v890 = vld [vmem:[%s706 + $0x18] sm:$0xff]
        %v891 = vld [vmem:[%s706 + $0x20] sm:$0xf]
        %v892 = vld [vmem:[%s706 + $0x24] sm:$0xff]
        %v893 = vld [vmem:[%s706 + $0x2c] sm:$0xf]
        %v894 = vld [vmem:[%s706 + $0x30] sm:$0xff]
        %v895 = vld [vmem:[%s706 + $0x38] sm:$0xf]
        %v896 = vld [vmem:[%s706 + $0x3c] sm:$0xff]
        %v897 = vld [vmem:[%s706 + $0x44] sm:$0xf]
        %v898 = vld [vmem:[%s706 + $0x48] sm:$0xff]
        %v899 = vld [vmem:[%s706 + $0x50] sm:$0xf]
        %v900 = vld [vmem:[%s706 + $0x54] sm:$0xff]
        %v901 = vld [vmem:[%s706 + $0x5c] sm:$0xf]
        %v902 = vld [vmem:[%s706 + $0x60] sm:$0xff]
        %v903 = vld [vmem:[%s706 + $0x68] sm:$0xf]
        %v904 = vld [vmem:[%s706 + $0x6c] sm:$0xff]
        %v905 = vld [vmem:[%s706 + $0x74] sm:$0xf]
        %v906 = vld [vmem:[%s706 + $0x78] sm:$0xff]
        %v907 = vld [vmem:[%s706 + $0x80] sm:$0xf]
        %v908 = vld [vmem:[%s706 + $0x84] sm:$0xff]
        %v909 = vld [vmem:[%s706 + $0x8c] sm:$0xf]
        %v910 = vld [vmem:[%s706 + $0x90] sm:$0xff]
        %v911 = vld [vmem:[%s706 + $0x98] sm:$0xf]
        %v912 = vld [vmem:[%s706 + $0x9c] sm:$0xff]
        %v913 = vld [vmem:[%s706 + $0xa4] sm:$0xf]
        %v914 = vld [vmem:[%s706 + $0xa8] sm:$0xff]
        %v915 = vld [vmem:[%s706 + $0xb0] sm:$0xf]
        %v916 = vld [vmem:[%s706 + $0xb4] sm:$0xff]
        %v917 = vld [vmem:[%s706 + $0xbc] sm:$0xf]
        %v918 = vld [vmem:[%s851] sm:$0x7]
        %v920 = vlaneseq
        %v921 = vshrl.u32 %v920, 7
        %v922 = vsub.s32 0, %v921
        %v923 = vrot.slane %v918, %v922
        %v924 = vlaneseq
        %v925 = vshrl.u32 %v924, 7
        %v926 = vsub.s32 1, %v925
        %v927 = vrot.slane %v918, %v926
        %v928 = vlaneseq
        %v929 = vshrl.u32 %v928, 7
        %v930 = vsub.s32 2, %v929
        %v931 = vrot.slane %v918, %v930
        %v967 = vunpack.c.l.b16 %v886
        %v968 = vunpack.c.h.b16 %v886
        %v969 = vunpack.c.l.b16 %v887
        %v970 = vunpack.c.l.b16 %v888
        %v971 = vunpack.c.h.b16 %v888
        %v972 = vunpack.c.l.b16 %v889
        %v973 = vunpack.c.l.b16 %v890
        %v974 = vunpack.c.h.b16 %v890
        %v975 = vunpack.c.l.b16 %v891
        %v976 = vunpack.c.l.b16 %v892
        %v977 = vunpack.c.h.b16 %v892
        %v978 = vunpack.c.l.b16 %v893
        %v979 = vunpack.c.l.b16 %v894
        %v980 = vunpack.c.h.b16 %v894
        %v981 = vunpack.c.l.b16 %v895
        %v982 = vunpack.c.l.b16 %v896
        %v983 = vunpack.c.h.b16 %v896
        %v984 = vunpack.c.l.b16 %v897
        %v985 = vunpack.c.l.b16 %v898
        %v986 = vunpack.c.h.b16 %v898
        %v987 = vunpack.c.l.b16 %v899
        %v988 = vunpack.c.l.b16 %v900
        %v989 = vunpack.c.h.b16 %v900
        %v990 = vunpack.c.l.b16 %v901
        %v991 = vunpack.c.l.b16 %v902
        %v992 = vunpack.c.h.b16 %v902
        %v993 = vunpack.c.l.b16 %v903
        %v994 = vunpack.c.l.b16 %v904
        %v995 = vunpack.c.h.b16 %v904
        %v996 = vunpack.c.l.b16 %v905
        %v997 = vunpack.c.l.b16 %v906
        %v998 = vunpack.c.h.b16 %v906
        %v999 = vunpack.c.l.b16 %v907
        %v1000 = vunpack.c.l.b16 %v908
        %v1001 = vunpack.c.h.b16 %v908
        %v1002 = vunpack.c.l.b16 %v909
        %v1003 = vunpack.c.l.b16 %v910
        %v1004 = vunpack.c.h.b16 %v910
        %v1005 = vunpack.c.l.b16 %v911
        %v1006 = vunpack.c.l.b16 %v912
        %v1007 = vunpack.c.h.b16 %v912
        %v1008 = vunpack.c.l.b16 %v913
        %v1009 = vunpack.c.l.b16 %v914
        %v1010 = vunpack.c.h.b16 %v914
        %v1011 = vunpack.c.l.b16 %v915
        %v1012 = vunpack.c.l.b16 %v916
        %v1013 = vunpack.c.h.b16 %v916
        %v1014 = vunpack.c.l.b16 %v917
        %v1015 = vpack.c.b16 %v970, %v967
        %v1016 = vpack.c.b16 %v971, %v968
        %v1017 = vpack.c.b16 %v972, %v969
        %v1018 = vpack.c.b16 %v976, %v973
        %v1019 = vpack.c.b16 %v977, %v974
        %v1020 = vpack.c.b16 %v978, %v975
        %v1021 = vpack.c.b16 %v982, %v979
        %v1022 = vpack.c.b16 %v983, %v980
        %v1023 = vpack.c.b16 %v984, %v981
        %v1024 = vpack.c.b16 %v988, %v985
        %v1025 = vpack.c.b16 %v989, %v986
        %v1026 = vpack.c.b16 %v990, %v987
        %v1027 = vpack.c.b16 %v994, %v991
        %v1028 = vpack.c.b16 %v995, %v992
        %v1029 = vpack.c.b16 %v996, %v993
        %v1030 = vpack.c.b16 %v1000, %v997
        %v1031 = vpack.c.b16 %v1001, %v998
        %v1032 = vpack.c.b16 %v1002, %v999
        %v1033 = vpack.c.b16 %v1006, %v1003
        %v1034 = vpack.c.b16 %v1007, %v1004
        %v1035 = vpack.c.b16 %v1008, %v1005
        %v1036 = vpack.c.b16 %v1012, %v1009
        %v1037 = vpack.c.b16 %v1013, %v1010
        %v1038 = vpack.c.b16 %v1014, %v1011
        %1063 = vmatprep.subr.bf16.mxu0 %v1016
        %1064 = vmatpush1.bf16.msra.mxu0 %v1015
        %1065 = vmatprep.subr.bf16.mxu0 %v1019
        %1066 = vmatpush1.bf16.msra.mxu0 %v1018
        %1067 = vmatprep.subr.bf16.mxu0 %v1022
        %1068 = vmatpush1.bf16.msra.mxu0 %v1021
        %1069 = vmatprep.subr.bf16.mxu0 %v1025
        %1070 = vmatpush1.bf16.msra.mxu0 %v1024
        %1071 = vmatprep.subr.bf16.mxu0 %v1028
        %1072 = vmatpush1.bf16.msra.mxu0 %v1027
        %1073 = vmatprep.subr.bf16.mxu0 %v1031
        %1074 = vmatpush1.bf16.msra.mxu0 %v1030
        %1075 = vmatprep.subr.bf16.mxu0 %v1034
        %1076 = vmatpush1.bf16.msra.mxu0 %v1033
        %1077 = vmatprep.subr.bf16.mxu0 %v1037
        %1078 = vmatpush1.bf16.msra.mxu0 %v1036
        %1079 = vmatprep.subr.bf16.mxu0 0
        %1080 = vmatpush1.bf16.msra.mxu0 0
        %1081 = vmatprep.subr.bf16.mxu0 0
        %1082 = vmatpush1.bf16.msra.mxu0 0
        %1083 = vmatprep.subr.bf16.mxu0 0
        %1084 = vmatpush1.bf16.msra.mxu0 0
        %1085 = vmatprep.subr.bf16.mxu0 0
        %1086 = vmatpush1.bf16.msra.mxu0 0
        %1087 = vmatprep.subr.bf16.mxu0 0
        %1088 = vmatpush1.bf16.msra.mxu0 0
        %1089 = vmatprep.subr.bf16.mxu0 0
        %1090 = vmatpush1.bf16.msra.mxu0 0
        %1091 = vmatprep.subr.bf16.mxu0 0
        %1092 = vmatpush1.bf16.msra.mxu0 0
        %1093 = vmatprep.subr.bf16.mxu0 0
        %1094 = vmatpush1.bf16.msra.mxu0 0
        %1095 = vmatprep.mubr.bf16.mxu0 0
        %1096 = vmatmul.mubr.bf16.gmra.mrb[0].mxu0 %v885
        %v1097 = vpop.f32.mrb[0].mxu0
        %v1098 = vadd.f32 %v923, %v1097
        %v1099 = vpop.f32.mrb[0].mxu0
        %v1100 = vadd.f32 %v927, %v1099
        %v1101 = vpop.f32.mrb[0].mxu0
        %v1102 = vadd.f32 %v923, %v1101
        %v1103 = vpop.f32.mrb[0].mxu0
        %v1104 = vadd.f32 %v927, %v1103
        %1105 = vdwg.mxu0
        %1106 = vmatprep.subr.bf16.mxu0 0
        %1107 = vmatpush1.bf16.msra.mxu0 %v1017
        %1108 = vmatprep.subr.bf16.mxu0 0
        %1109 = vmatpush1.bf16.msra.mxu0 %v1020
        %1110 = vmatprep.subr.bf16.mxu0 0
        %1111 = vmatpush1.bf16.msra.mxu0 %v1023
        %1112 = vmatprep.subr.bf16.mxu0 0
        %1113 = vmatpush1.bf16.msra.mxu0 %v1026
        %1114 = vmatprep.subr.bf16.mxu0 0
        %1115 = vmatpush1.bf16.msra.mxu0 %v1029
        %1116 = vmatprep.subr.bf16.mxu0 0
        %1117 = vmatpush1.bf16.msra.mxu0 %v1032
        %1118 = vmatprep.subr.bf16.mxu0 0
        %1119 = vmatpush1.bf16.msra.mxu0 %v1035
        %1120 = vmatprep.subr.bf16.mxu0 0
        %1121 = vmatpush1.bf16.msra.mxu0 %v1038
        %1122 = vmatprep.subr.bf16.mxu0 0
        %1123 = vmatpush1.bf16.msra.mxu0 0
        %1124 = vmatprep.subr.bf16.mxu0 0
        %1125 = vmatpush1.bf16.msra.mxu0 0
        %1126 = vmatprep.subr.bf16.mxu0 0
        %1127 = vmatpush1.bf16.msra.mxu0 0
        %1128 = vmatprep.subr.bf16.mxu0 0
        %1129 = vmatpush1.bf16.msra.mxu0 0
        %1130 = vmatprep.subr.bf16.mxu0 0
        %1131 = vmatpush1.bf16.msra.mxu0 0
        %1132 = vmatprep.subr.bf16.mxu0 0
        %1133 = vmatpush1.bf16.msra.mxu0 0
        %1134 = vmatprep.subr.bf16.mxu0 0
        %1135 = vmatpush1.bf16.msra.mxu0 0
        %1136 = vmatprep.subr.bf16.mxu0 0
        %1137 = vmatpush1.bf16.msra.mxu0 0
        %1138 = vmatprep.mubr.bf16.mxu0 0
        %1139 = vmatmul.mubr.bf16.gmra.mrb[0].mxu0 %v885
        %v1140 = vpop.f32.mrb[0].mxu0
        %v1141 = vadd.f32 %v931, %v1140
        %v1142 = vpop.f32.mrb[0].mxu0
        %v1143 = vpop.f32.mrb[0].mxu0
        %v1144 = vadd.f32 %v931, %v1143
        %v1145 = vpop.f32.mrb[0].mxu0
        %1146 = vdwg.mxu0
        %v1147 = vpack.c.bf16 %v1104, %v1100
        %v1148 = vpack.c.bf16 %v1144, %v1141
        %v1149 = vld [vmem:[%s2] sm:$0x1]
        %v1150 = vld [vmem:[%s2 + $0x1] sm:$0x1]
        %v1151 = vld [vmem:[%s2 + $0x2] sm:$0x1]
        %v1152 = vld [vmem:[%s2 + $0x3] sm:$0x1]
        %v1157 = vlaneseq
        %v1158 = vshrl.u32 %v1157, 7
        %v1159 = vsub.s32 0, %v1158
        %v1160 = vrot.slane %v1149, %v1159
        %v1161 = vlaneseq
        %v1162 = vshrl.u32 %v1161, 7
        %v1163 = vsub.s32 0, %v1162
        %v1164 = vrot.slane %v1150, %v1163
        %v1165 = vlaneseq
        %v1166 = vshrl.u32 %v1165, 7
        %v1167 = vsub.s32 0, %v1166
        %v1168 = vrot.slane %v1151, %v1167
        %v1169 = vlaneseq
        %v1170 = vshrl.u32 %v1169, 7
        %v1171 = vsub.s32 0, %v1170
        %v1172 = vrot.slane %v1152, %v1171
        %v1177 = vmul.f32 %v1098, %v1160
        %v1178 = vmul.f32 %v1102, %v1160
        %v1179 = vmul.f32 %v1098, %v1164
        %v1180 = vmul.f32 %v1102, %v1164
        %v1181 = vmul.f32 %v1098, %v1168
        %v1182 = vmul.f32 %v1102, %v1168
        %v1183 = vmul.f32 %v1098, %v1172
        %v1184 = vmul.f32 %v1102, %v1172
        %v1185 = vpack.c.bf16 %v1178, %v1177
        %v1186 = vpack.c.bf16 %v1180, %v1179
        %v1187 = vpack.c.bf16 %v1182, %v1181
        %v1188 = vpack.c.bf16 %v1184, %v1183
        %1189 = vmatprep.subr.bf16.mxu0 0
        %1190 = vmatpush1.bf16.xpose.msra.mxu0 %v1147
        %1191 = vmatprep.subr.bf16.mxu0 0
        %1192 = vmatpush1.bf16.xpose.msra.mxu0 0
        %1193 = vmatprep.subr.bf16.mxu0 0
        %1194 = vmatpush1.bf16.xpose.msra.mxu0 0
        %1195 = vmatprep.subr.bf16.mxu0 0
        %1196 = vmatpush1.bf16.xpose.msra.mxu0 0
        %1197 = vmatprep.subr.bf16.mxu0 0
        %1198 = vmatpush1.bf16.xpose.msra.mxu0 0
        %1199 = vmatprep.subr.bf16.mxu0 0
        %1200 = vmatpush1.bf16.xpose.msra.mxu0 0
        %1201 = vmatprep.subr.bf16.mxu0 0
        %1202 = vmatpush1.bf16.xpose.msra.mxu0 0
        %1203 = vmatprep.subr.bf16.mxu0 0
        %1204 = vmatpush1.bf16.xpose.msra.mxu0 0
        %1205 = vmatprep.subr.bf16.mxu0 0
        %1206 = vmatpush1.bf16.xpose.msra.mxu0 0
        %1207 = vmatprep.subr.bf16.mxu0 0
        %1208 = vmatpush1.bf16.xpose.msra.mxu0 0
        %1209 = vmatprep.subr.bf16.mxu0 0
        %1210 = vmatpush1.bf16.xpose.msra.mxu0 0
        %1211 = vmatprep.subr.bf16.mxu0 0
        %1212 = vmatpush1.bf16.xpose.msra.mxu0 0
        %1213 = vmatprep.subr.bf16.mxu0 0
        %1214 = vmatpush1.bf16.xpose.msra.mxu0 0
        %1215 = vmatprep.subr.bf16.mxu0 0
        %1216 = vmatpush1.bf16.xpose.msra.mxu0 0
        %1217 = vmatprep.subr.bf16.mxu0 0
        %1218 = vmatpush1.bf16.xpose.msra.mxu0 0
        %1219 = vmatprep.subr.bf16.mxu0 0
        %1220 = vmatpush1.bf16.xpose.msra.mxu0 0
        %1221 = vmatprep.mubr.bf16.mxu0 0
        %1222 = vmatmul.mubr.bf16.gmra.mrb[0].mxu0 %v1185
        %v1223 = vpop.f32.mrb[0].mxu0
        %v1224 = vadd.f32 0.0, %v1223
        %v1225 = vpop.f32.mrb[0].mxu0
        %v1226 = vpop.f32.mrb[0].mxu0
        %v1227 = vadd.f32 0.0, %v1226
        %v1228 = vpop.f32.mrb[0].mxu0
        %1229 = vmatprep.mubr.bf16.mxu0 0
        %1230 = vmatmul.mubr.bf16.gmra.mrb[0].mxu0 %v1186
        %v1231 = vpop.f32.mrb[0].mxu0
        %v1232 = vadd.f32 0.0, %v1231
        %v1233 = vpop.f32.mrb[0].mxu0
        %v1234 = vpop.f32.mrb[0].mxu0
        %v1235 = vadd.f32 0.0, %v1234
        %v1236 = vpop.f32.mrb[0].mxu0
        %1237 = vmatprep.mubr.bf16.mxu0 0
        %1238 = vmatmul.mubr.bf16.gmra.mrb[0].mxu0 %v1187
        %v1239 = vpop.f32.mrb[0].mxu0
        %v1240 = vadd.f32 0.0, %v1239
        %v1241 = vpop.f32.mrb[0].mxu0
        %v1242 = vpop.f32.mrb[0].mxu0
        %v1243 = vadd.f32 0.0, %v1242
        %v1244 = vpop.f32.mrb[0].mxu0
        %1245 = vmatprep.mubr.bf16.mxu0 0
        %1246 = vmatmul.mubr.bf16.gmra.mrb[0].mxu0 %v1188
        %v1247 = vpop.f32.mrb[0].mxu0
        %v1248 = vadd.f32 0.0, %v1247
        %v1249 = vpop.f32.mrb[0].mxu0
        %v1250 = vpop.f32.mrb[0].mxu0
        %v1251 = vadd.f32 0.0, %v1250
        %v1252 = vpop.f32.mrb[0].mxu0
        %1253 = vdwg.mxu0
        %v1254 = vld [vmem:[%s1] sm:$0xff]
        %v1255 = vld [vmem:[%s1 + $0x8] sm:$0xff]
        %v1256 = vadd.f32 %v1224, %v1254
        %v1257 = vadd.f32 %v1227, %v1255
        %v1258 = vadd.f32 %v1232, %v1254
        %v1259 = vadd.f32 %v1235, %v1255
        %v1260 = vadd.f32 %v1240, %v1254
        %v1261 = vadd.f32 %v1243, %v1255
        %v1262 = vadd.f32 %v1248, %v1254
        %v1263 = vadd.f32 %v1251, %v1255
        %vm1264 = vcmask 130048
        %v1265 = vsel %vm1264, %v1256, -inf
        %1266 = vmax.xlane.f32.xlu0 %v1265
        %v1267 = vpop.xlane.xlu0 %1266
        %v1268 = vsel %vm1264, %v1257, -inf
        %1269 = vmax.xlane.f32.xlu0 %v1268
        %v1270 = vpop.xlane.xlu0 %1269
        %v1271 = vsel %vm1264, %v1258, -inf
        %1272 = vmax.xlane.f32.xlu0 %v1271
        %v1273 = vpop.xlane.xlu0 %1272
        %v1274 = vsel %vm1264, %v1259, -inf
        %1275 = vmax.xlane.f32.xlu0 %v1274
        %v1276 = vpop.xlane.xlu0 %1275
        %v1277 = vsel %vm1264, %v1260, -inf
        %1278 = vmax.xlane.f32.xlu0 %v1277
        %v1279 = vpop.xlane.xlu0 %1278
        %v1280 = vsel %vm1264, %v1261, -inf
        %1281 = vmax.xlane.f32.xlu0 %v1280
        %v1282 = vpop.xlane.xlu0 %1281
        %v1283 = vsel %vm1264, %v1262, -inf
        %1284 = vmax.xlane.f32.xlu0 %v1283
        %v1285 = vpop.xlane.xlu0 %1284
        %v1286 = vsel %vm1264, %v1263, -inf
        %1287 = vmax.xlane.f32.xlu0 %v1286
        %v1288 = vpop.xlane.xlu0 %1287
        %v1289 = vsub.f32 %v1256, %v1267
        %v1290 = vsub.f32 %v1257, %v1270
        %v1291 = vsub.f32 %v1258, %v1273
        %v1292 = vsub.f32 %v1259, %v1276
        %v1293 = vsub.f32 %v1260, %v1279
        %v1294 = vsub.f32 %v1261, %v1282
        %v1295 = vsub.f32 %v1262, %v1285
        %v1296 = vsub.f32 %v1263, %v1288
        %v1297 = vmul.f32 %v1289, 1.442695
        %v1298 = vpow.pop %v1297
        %v1299 = vmul.f32 %v1290, 1.442695
        %v1300 = vpow.pop %v1299
        %v1301 = vmul.f32 %v1291, 1.442695
        %v1302 = vpow.pop %v1301
        %v1303 = vmul.f32 %v1292, 1.442695
        %v1304 = vpow.pop %v1303
        %v1305 = vmul.f32 %v1293, 1.442695
        %v1306 = vpow.pop %v1305
        %v1307 = vmul.f32 %v1294, 1.442695
        %v1308 = vpow.pop %v1307
        %v1309 = vmul.f32 %v1295, 1.442695
        %v1310 = vpow.pop %v1309
        %v1311 = vmul.f32 %v1296, 1.442695
        %v1312 = vpow.pop %v1311
        %v1313 = vsel %vm1264, %v1298, 0.0
        %1314 = vadd.xlane.f32.xlu0 %v1313
        %v1315 = vpop.xlane.xlu0 %1314
        %v1316 = vsel %vm1264, %v1300, 0.0
        %1317 = vadd.xlane.f32.xlu0 %v1316
        %v1318 = vpop.xlane.xlu0 %1317
        %v1319 = vsel %vm1264, %v1302, 0.0
        %1320 = vadd.xlane.f32.xlu0 %v1319
        %v1321 = vpop.xlane.xlu0 %1320
        %v1322 = vsel %vm1264, %v1304, 0.0
        %1323 = vadd.xlane.f32.xlu0 %v1322
        %v1324 = vpop.xlane.xlu0 %1323
        %v1325 = vsel %vm1264, %v1306, 0.0
        %1326 = vadd.xlane.f32.xlu0 %v1325
        %v1327 = vpop.xlane.xlu0 %1326
        %v1328 = vsel %vm1264, %v1308, 0.0
        %1329 = vadd.xlane.f32.xlu0 %v1328
        %v1330 = vpop.xlane.xlu0 %1329
        %v1331 = vsel %vm1264, %v1310, 0.0
        %1332 = vadd.xlane.f32.xlu0 %v1331
        %v1333 = vpop.xlane.xlu0 %1332
        %v1334 = vsel %vm1264, %v1312, 0.0
        %1335 = vadd.xlane.f32.xlu0 %v1334
        %v1336 = vpop.xlane.xlu0 %1335
        %v1337 = vrcp.pop %v1315
        %v1338 = vrcp.pop %v1318
        %v1339 = vrcp.pop %v1321
        %v1340 = vrcp.pop %v1324
        %v1341 = vrcp.pop %v1327
        %v1342 = vrcp.pop %v1330
        %v1343 = vrcp.pop %v1333
        %v1344 = vrcp.pop %v1336
        %v1345 = vmul.f32 %v1298, %v1337
        %v1346 = vmul.f32 %v1300, %v1338
        %v1347 = vmul.f32 %v1302, %v1339
        %v1348 = vmul.f32 %v1304, %v1340
        %v1349 = vmul.f32 %v1306, %v1341
        %v1350 = vmul.f32 %v1308, %v1342
        %v1351 = vmul.f32 %v1310, %v1343
        %v1352 = vmul.f32 %v1312, %v1344
        %v1353 = vpack.c.bf16 %v1346, %v1345
        %v1354 = vpack.c.bf16 %v1348, %v1347
        %v1355 = vpack.c.bf16 %v1350, %v1349
        %v1356 = vpack.c.bf16 %v1352, %v1351
        %v1358 = vsel %vm1264, %v1353, 0
        %v1361 = vsel %vm1264, %v1354, 0
        %v1364 = vsel %vm1264, %v1355, 0
        %v1367 = vsel %vm1264, %v1356, 0
        %1369 = vmatprep.subr.bf16.mxu0 0
        %1370 = vmatpush1.bf16.msra.mxu0 %v1148
        %1371 = vmatprep.subr.bf16.mxu0 0
        %1372 = vmatpush1.bf16.msra.mxu0 0
        %1373 = vmatprep.subr.bf16.mxu0 0
        %1374 = vmatpush1.bf16.msra.mxu0 0
        %1375 = vmatprep.subr.bf16.mxu0 0
        %1376 = vmatpush1.bf16.msra.mxu0 0
        %1377 = vmatprep.subr.bf16.mxu0 0
        %1378 = vmatpush1.bf16.msra.mxu0 0
        %1379 = vmatprep.subr.bf16.mxu0 0
        %1380 = vmatpush1.bf16.msra.mxu0 0
        %1381 = vmatprep.subr.bf16.mxu0 0
        %1382 = vmatpush1.bf16.msra.mxu0 0
        %1383 = vmatprep.subr.bf16.mxu0 0
        %1384 = vmatpush1.bf16.msra.mxu0 0
        %1385 = vmatprep.subr.bf16.mxu0 0
        %1386 = vmatpush1.bf16.msra.mxu0 0
        %1387 = vmatprep.subr.bf16.mxu0 0
        %1388 = vmatpush1.bf16.msra.mxu0 0
        %1389 = vmatprep.subr.bf16.mxu0 0
        %1390 = vmatpush1.bf16.msra.mxu0 0
        %1391 = vmatprep.subr.bf16.mxu0 0
        %1392 = vmatpush1.bf16.msra.mxu0 0
        %1393 = vmatprep.subr.bf16.mxu0 0
        %1394 = vmatpush1.bf16.msra.mxu0 0
        %1395 = vmatprep.subr.bf16.mxu0 0
        %1396 = vmatpush1.bf16.msra.mxu0 0
        %1397 = vmatprep.subr.bf16.mxu0 0
        %1398 = vmatpush1.bf16.msra.mxu0 0
        %1399 = vmatprep.subr.bf16.mxu0 0
        %1400 = vmatpush1.bf16.msra.mxu0 0
        %1401 = vmatprep.mubr.bf16.mxu0 0
        %1402 = vmatmul.mubr.bf16.gmra.mrb[0].mxu0 %v1358
        %v1403 = vpop.f32.mrb[0].mxu0
        %v1404 = vadd.f32 0.0, %v1403
        %v1405 = vpop.f32.mrb[0].mxu0
        %v1406 = vpop.f32.mrb[0].mxu0
        %v1407 = vadd.f32 0.0, %v1406
        %v1408 = vpop.f32.mrb[0].mxu0
        %1409 = vmatprep.mubr.bf16.mxu0 0
        %1410 = vmatmul.mubr.bf16.gmra.mrb[0].mxu0 %v1361
        %v1411 = vpop.f32.mrb[0].mxu0
        %v1412 = vadd.f32 0.0, %v1411
        %v1413 = vpop.f32.mrb[0].mxu0
        %v1414 = vpop.f32.mrb[0].mxu0
        %v1415 = vadd.f32 0.0, %v1414
        %v1416 = vpop.f32.mrb[0].mxu0
        %1417 = vmatprep.mubr.bf16.mxu0 0
        %1418 = vmatmul.mubr.bf16.gmra.mrb[0].mxu0 %v1364
        %v1419 = vpop.f32.mrb[0].mxu0
        %v1420 = vadd.f32 0.0, %v1419
        %v1421 = vpop.f32.mrb[0].mxu0
        %v1422 = vpop.f32.mrb[0].mxu0
        %v1423 = vadd.f32 0.0, %v1422
        %v1424 = vpop.f32.mrb[0].mxu0
        %1425 = vmatprep.mubr.bf16.mxu0 0
        %1426 = vmatmul.mubr.bf16.gmra.mrb[0].mxu0 %v1367
        %v1427 = vpop.f32.mrb[0].mxu0
        %v1428 = vadd.f32 0.0, %v1427
        %v1429 = vpop.f32.mrb[0].mxu0
        %v1430 = vpop.f32.mrb[0].mxu0
        %v1431 = vadd.f32 0.0, %v1430
        %v1432 = vpop.f32.mrb[0].mxu0
        %1433 = vdwg.mxu0
        %v1434 = vmul.f32 %v1404, %v1160
        %v1435 = vmul.f32 %v1407, %v1160
        %v1436 = vmul.f32 %v1412, %v1164
        %v1437 = vmul.f32 %v1415, %v1164
        %v1438 = vmul.f32 %v1420, %v1168
        %v1439 = vmul.f32 %v1423, %v1168
        %v1440 = vmul.f32 %v1428, %v1172
        %v1441 = vmul.f32 %v1431, %v1172
        %v1442 = vadd.f32 %v1434, %v1436
        %v1443 = vadd.f32 %v1442, %v1438
        %v1444 = vadd.f32 %v1443, %v1440
        %v1445 = vadd.f32 %v1435, %v1437
        %v1446 = vadd.f32 %v1445, %v1439
        %v1447 = vadd.f32 %v1446, %v1441
        %v1448 = vpack.c.bf16 %v1447, %v1444
        %v1449 = vld [vmem:[%s856] sm:$0xf]
        %v1450 = vld [vmem:[%s856 + $0x4] sm:$0xf]
        %v1451 = vld [vmem:[%s856 + $0x8] sm:$0xf]
        %v1452 = vld [vmem:[%s856 + $0xc] sm:$0xf]
        %v1453 = vld [vmem:[%s856 + $0x10] sm:$0xf]
        %v1454 = vld [vmem:[%s856 + $0x14] sm:$0xf]
        %v1455 = vld [vmem:[%s856 + $0x18] sm:$0xf]
        %v1456 = vld [vmem:[%s856 + $0x1c] sm:$0xf]
        %v1457 = vld [vmem:[%s856 + $0x20] sm:$0xf]
        %v1458 = vld [vmem:[%s856 + $0x24] sm:$0xf]
        %v1459 = vld [vmem:[%s856 + $0x28] sm:$0xf]
        %v1460 = vld [vmem:[%s856 + $0x2c] sm:$0xf]
        %v1461 = vld [vmem:[%s856 + $0x30] sm:$0xf]
        %v1462 = vld [vmem:[%s856 + $0x34] sm:$0xf]
        %v1463 = vld [vmem:[%s856 + $0x38] sm:$0xf]
        %v1464 = vld [vmem:[%s856 + $0x3c] sm:$0xf]
        %v1465 = vld [vmem:[%s859] sm:$0x1]
        %v1467 = vlaneseq
        %v1468 = vshrl.u32 %v1467, 7
        %v1469 = vsub.s32 0, %v1468
        %v1470 = vrot.slane %v1465, %v1469
        %v1488 = vunpack.c.l.b16 %v1449
        %v1489 = vunpack.c.l.b16 %v1450
        %v1490 = vunpack.c.l.b16 %v1451
        %v1491 = vunpack.c.l.b16 %v1452
        %v1492 = vunpack.c.l.b16 %v1453
        %v1493 = vunpack.c.l.b16 %v1454
        %v1494 = vunpack.c.l.b16 %v1455
        %v1495 = vunpack.c.l.b16 %v1456
        %v1496 = vunpack.c.l.b16 %v1457
        %v1497 = vunpack.c.l.b16 %v1458
        %v1498 = vunpack.c.l.b16 %v1459
        %v1499 = vunpack.c.l.b16 %v1460
        %v1500 = vunpack.c.l.b16 %v1461
        %v1501 = vunpack.c.l.b16 %v1462
        %v1502 = vunpack.c.l.b16 %v1463
        %v1503 = vunpack.c.l.b16 %v1464
        %v1504 = vpack.c.b16 %v1489, %v1488
        %v1505 = vpack.c.b16 %v1491, %v1490
        %v1506 = vpack.c.b16 %v1493, %v1492
        %v1507 = vpack.c.b16 %v1495, %v1494
        %v1508 = vpack.c.b16 %v1497, %v1496
        %v1509 = vpack.c.b16 %v1499, %v1498
        %v1510 = vpack.c.b16 %v1501, %v1500
        %v1511 = vpack.c.b16 %v1503, %v1502
        %1520 = vmatprep.subr.bf16.mxu0 0
        %1521 = vmatpush1.bf16.msra.mxu0 %v1504
        %1522 = vmatprep.subr.bf16.mxu0 0
        %1523 = vmatpush1.bf16.msra.mxu0 %v1505
        %1524 = vmatprep.subr.bf16.mxu0 0
        %1525 = vmatpush1.bf16.msra.mxu0 %v1506
        %1526 = vmatprep.subr.bf16.mxu0 0
        %1527 = vmatpush1.bf16.msra.mxu0 %v1507
        %1528 = vmatprep.subr.bf16.mxu0 0
        %1529 = vmatpush1.bf16.msra.mxu0 %v1508
        %1530 = vmatprep.subr.bf16.mxu0 0
        %1531 = vmatpush1.bf16.msra.mxu0 %v1509
        %1532 = vmatprep.subr.bf16.mxu0 0
        %1533 = vmatpush1.bf16.msra.mxu0 %v1510
        %1534 = vmatprep.subr.bf16.mxu0 0
        %1535 = vmatpush1.bf16.msra.mxu0 %v1511
        %1536 = vmatprep.subr.bf16.mxu0 0
        %1537 = vmatpush1.bf16.msra.mxu0 0
        %1538 = vmatprep.subr.bf16.mxu0 0
        %1539 = vmatpush1.bf16.msra.mxu0 0
        %1540 = vmatprep.subr.bf16.mxu0 0
        %1541 = vmatpush1.bf16.msra.mxu0 0
        %1542 = vmatprep.subr.bf16.mxu0 0
        %1543 = vmatpush1.bf16.msra.mxu0 0
        %1544 = vmatprep.subr.bf16.mxu0 0
        %1545 = vmatpush1.bf16.msra.mxu0 0
        %1546 = vmatprep.subr.bf16.mxu0 0
        %1547 = vmatpush1.bf16.msra.mxu0 0
        %1548 = vmatprep.subr.bf16.mxu0 0
        %1549 = vmatpush1.bf16.msra.mxu0 0
        %1550 = vmatprep.subr.bf16.mxu0 0
        %1551 = vmatpush1.bf16.msra.mxu0 0
        %1552 = vmatprep.mubr.bf16.mxu0 0
        %1553 = vmatmul.mubr.bf16.gmra.mrb[0].mxu0 %v1448
        %v1554 = vpop.f32.mrb[0].mxu0
        %v1555 = vadd.f32 %v1470, %v1554
        %v1556 = vpop.f32.mrb[0].mxu0
        %v1557 = vpop.f32.mrb[0].mxu0
        %v1558 = vadd.f32 %v1470, %v1557
        %v1559 = vpop.f32.mrb[0].mxu0
        %1560 = vdwg.mxu0
        %v1561 = vadd.f32 %v883, %v1555
        %v1562 = vadd.f32 %v884, %v1558
        %v1563 = vld [vmem:[%s862] sm:$0x1]
        %v1564 = vld [vmem:[%s865] sm:$0x1]
        %1565 = vadd.xlane.f32.xlu0 %v1561
        %v1566 = vpop.xlane.xlu0 %1565
        %1567 = vadd.xlane.f32.xlu0 %v1562
        %v1568 = vpop.xlane.xlu0 %1567
        %v1569 = vrcp.pop 128.0
        %v1570 = vmul.f32 %v1566, %v1569
        %v1571 = vmul.f32 %v1568, %v1569
        %v1572 = vsub.f32 %v1561, %v1570
        %v1573 = vsub.f32 %v1562, %v1571
        %v1574 = vmul.f32 %v1572, %v1572
        %v1575 = vmul.f32 %v1573, %v1573
        %1576 = vadd.xlane.f32.xlu0 %v1574
        %v1577 = vpop.xlane.xlu0 %1576
        %1578 = vadd.xlane.f32.xlu0 %v1575
        %v1579 = vpop.xlane.xlu0 %1578
        %v1580 = vmul.f32 %v1577, %v1569
        %v1581 = vmul.f32 %v1579, %v1569
        %v1582 = vadd.f32 %v1580, 1e-05
        %v1583 = vadd.f32 %v1581, 1e-05
        %v1584 = vrsqrt.pop %v1582
        %v1585 = vrsqrt.pop %v1583
        %v1586 = vmul.f32 %v1572, %v1584
        %v1587 = vmul.f32 %v1573, %v1585
        %v1589 = vlaneseq
        %v1590 = vshrl.u32 %v1589, 7
        %v1591 = vsub.s32 0, %v1590
        %v1592 = vrot.slane %v1563, %v1591
        %v1594 = vmul.f32 %v1586, %v1592
        %v1595 = vmul.f32 %v1587, %v1592
        %v1597 = vlaneseq
        %v1598 = vshrl.u32 %v1597, 7
        %v1599 = vsub.s32 0, %v1598
        %v1600 = vrot.slane %v1564, %v1599
        %v1602 = vadd.f32 %v1594, %v1600
        %v1603 = vadd.f32 %v1595, %v1600
        %v1604 = vpack.c.bf16 %v1603, %v1602
        %v1605 = vld [vmem:[%s715] sm:$0xff]
        %v1606 = vld [vmem:[%s715 + $0x8] sm:$0xff]
        %v1607 = vld [vmem:[%s715 + $0x10] sm:$0xff]
        %v1608 = vld [vmem:[%s715 + $0x18] sm:$0xff]
        %v1609 = vld [vmem:[%s715 + $0x20] sm:$0xff]
        %v1610 = vld [vmem:[%s715 + $0x28] sm:$0xff]
        %v1611 = vld [vmem:[%s715 + $0x30] sm:$0xff]
        %v1612 = vld [vmem:[%s715 + $0x38] sm:$0xff]
        %v1613 = vld [vmem:[%s715 + $0x40] sm:$0xff]
        %v1614 = vld [vmem:[%s715 + $0x48] sm:$0xff]
        %v1615 = vld [vmem:[%s715 + $0x50] sm:$0xff]
        %v1616 = vld [vmem:[%s715 + $0x58] sm:$0xff]
        %v1617 = vld [vmem:[%s715 + $0x60] sm:$0xff]
        %v1618 = vld [vmem:[%s715 + $0x68] sm:$0xff]
        %v1619 = vld [vmem:[%s715 + $0x70] sm:$0xff]
        %v1620 = vld [vmem:[%s715 + $0x78] sm:$0xff]
        %v1621 = vld [vmem:[%s715 + $0x80] sm:$0xff]
        %v1622 = vld [vmem:[%s715 + $0x88] sm:$0xff]
        %v1623 = vld [vmem:[%s715 + $0x90] sm:$0xff]
        %v1624 = vld [vmem:[%s715 + $0x98] sm:$0xff]
        %v1625 = vld [vmem:[%s715 + $0xa0] sm:$0xff]
        %v1626 = vld [vmem:[%s715 + $0xa8] sm:$0xff]
        %v1627 = vld [vmem:[%s715 + $0xb0] sm:$0xff]
        %v1628 = vld [vmem:[%s715 + $0xb8] sm:$0xff]
        %v1629 = vld [vmem:[%s715 + $0xc0] sm:$0xff]
        %v1630 = vld [vmem:[%s715 + $0xc8] sm:$0xff]
        %v1631 = vld [vmem:[%s715 + $0xd0] sm:$0xff]
        %v1632 = vld [vmem:[%s715 + $0xd8] sm:$0xff]
        %v1633 = vld [vmem:[%s715 + $0xe0] sm:$0xff]
        %v1634 = vld [vmem:[%s715 + $0xe8] sm:$0xff]
        %v1635 = vld [vmem:[%s715 + $0xf0] sm:$0xff]
        %v1636 = vld [vmem:[%s715 + $0xf8] sm:$0xff]
        %v1637 = vld [vmem:[%s869] sm:$0xf]
        %v1639 = vlaneseq
        %v1640 = vshrl.u32 %v1639, 7
        %v1641 = vsub.s32 0, %v1640
        %v1642 = vrot.slane %v1637, %v1641
        %v1643 = vlaneseq
        %v1644 = vshrl.u32 %v1643, 7
        %v1645 = vsub.s32 1, %v1644
        %v1646 = vrot.slane %v1637, %v1645
        %v1647 = vlaneseq
        %v1648 = vshrl.u32 %v1647, 7
        %v1649 = vsub.s32 2, %v1648
        %v1650 = vrot.slane %v1637, %v1649
        %v1651 = vlaneseq
        %v1652 = vshrl.u32 %v1651, 7
        %v1653 = vsub.s32 3, %v1652
        %v1654 = vrot.slane %v1637, %v1653
        %v1691 = vunpack.c.l.b16 %v1605
        %v1692 = vunpack.c.h.b16 %v1605
        %v1693 = vunpack.c.l.b16 %v1606
        %v1694 = vunpack.c.h.b16 %v1606
        %v1695 = vunpack.c.l.b16 %v1607
        %v1696 = vunpack.c.h.b16 %v1607
        %v1697 = vunpack.c.l.b16 %v1608
        %v1698 = vunpack.c.h.b16 %v1608
        %v1699 = vunpack.c.l.b16 %v1609
        %v1700 = vunpack.c.h.b16 %v1609
        %v1701 = vunpack.c.l.b16 %v1610
        %v1702 = vunpack.c.h.b16 %v1610
        %v1703 = vunpack.c.l.b16 %v1611
        %v1704 = vunpack.c.h.b16 %v1611
        %v1705 = vunpack.c.l.b16 %v1612
        %v1706 = vunpack.c.h.b16 %v1612
        %v1707 = vunpack.c.l.b16 %v1613
        %v1708 = vunpack.c.h.b16 %v1613
        %v1709 = vunpack.c.l.b16 %v1614
        %v1710 = vunpack.c.h.b16 %v1614
        %v1711 = vunpack.c.l.b16 %v1615
        %v1712 = vunpack.c.h.b16 %v1615
        %v1713 = vunpack.c.l.b16 %v1616
        %v1714 = vunpack.c.h.b16 %v1616
        %v1715 = vunpack.c.l.b16 %v1617
        %v1716 = vunpack.c.h.b16 %v1617
        %v1717 = vunpack.c.l.b16 %v1618
        %v1718 = vunpack.c.h.b16 %v1618
        %v1719 = vunpack.c.l.b16 %v1619
        %v1720 = vunpack.c.h.b16 %v1619
        %v1721 = vunpack.c.l.b16 %v1620
        %v1722 = vunpack.c.h.b16 %v1620
        %v1723 = vunpack.c.l.b16 %v1621
        %v1724 = vunpack.c.h.b16 %v1621
        %v1725 = vunpack.c.l.b16 %v1622
        %v1726 = vunpack.c.h.b16 %v1622
        %v1727 = vunpack.c.l.b16 %v1623
        %v1728 = vunpack.c.h.b16 %v1623
        %v1729 = vunpack.c.l.b16 %v1624
        %v1730 = vunpack.c.h.b16 %v1624
        %v1731 = vunpack.c.l.b16 %v1625
        %v1732 = vunpack.c.h.b16 %v1625
        %v1733 = vunpack.c.l.b16 %v1626
        %v1734 = vunpack.c.h.b16 %v1626
        %v1735 = vunpack.c.l.b16 %v1627
        %v1736 = vunpack.c.h.b16 %v1627
        %v1737 = vunpack.c.l.b16 %v1628
        %v1738 = vunpack.c.h.b16 %v1628
        %v1739 = vunpack.c.l.b16 %v1629
        %v1740 = vunpack.c.h.b16 %v1629
        %v1741 = vunpack.c.l.b16 %v1630
        %v1742 = vunpack.c.h.b16 %v1630
        %v1743 = vunpack.c.l.b16 %v1631
        %v1744 = vunpack.c.h.b16 %v1631
        %v1745 = vunpack.c.l.b16 %v1632
        %v1746 = vunpack.c.h.b16 %v1632
        %v1747 = vunpack.c.l.b16 %v1633
        %v1748 = vunpack.c.h.b16 %v1633
        %v1749 = vunpack.c.l.b16 %v1634
        %v1750 = vunpack.c.h.b16 %v1634
        %v1751 = vunpack.c.l.b16 %v1635
        %v1752 = vunpack.c.h.b16 %v1635
        %v1753 = vunpack.c.l.b16 %v1636
        %v1754 = vunpack.c.h.b16 %v1636
        %v1755 = vpack.c.b16 %v1695, %v1691
        %v1756 = vpack.c.b16 %v1696, %v1692
        %v1757 = vpack.c.b16 %v1697, %v1693
        %v1758 = vpack.c.b16 %v1698, %v1694
        %v1759 = vpack.c.b16 %v1703, %v1699
        %v1760 = vpack.c.b16 %v1704, %v1700
        %v1761 = vpack.c.b16 %v1705, %v1701
        %v1762 = vpack.c.b16 %v1706, %v1702
        %v1763 = vpack.c.b16 %v1711, %v1707
        %v1764 = vpack.c.b16 %v1712, %v1708
        %v1765 = vpack.c.b16 %v1713, %v1709
        %v1766 = vpack.c.b16 %v1714, %v1710
        %v1767 = vpack.c.b16 %v1719, %v1715
        %v1768 = vpack.c.b16 %v1720, %v1716
        %v1769 = vpack.c.b16 %v1721, %v1717
        %v1770 = vpack.c.b16 %v1722, %v1718
        %v1771 = vpack.c.b16 %v1727, %v1723
        %v1772 = vpack.c.b16 %v1728, %v1724
        %v1773 = vpack.c.b16 %v1729, %v1725
        %v1774 = vpack.c.b16 %v1730, %v1726
        %v1775 = vpack.c.b16 %v1735, %v1731
        %v1776 = vpack.c.b16 %v1736, %v1732
        %v1777 = vpack.c.b16 %v1737, %v1733
        %v1778 = vpack.c.b16 %v1738, %v1734
        %v1779 = vpack.c.b16 %v1743, %v1739
        %v1780 = vpack.c.b16 %v1744, %v1740
        %v1781 = vpack.c.b16 %v1745, %v1741
        %v1782 = vpack.c.b16 %v1746, %v1742
        %v1783 = vpack.c.b16 %v1751, %v1747
        %v1784 = vpack.c.b16 %v1752, %v1748
        %v1785 = vpack.c.b16 %v1753, %v1749
        %v1786 = vpack.c.b16 %v1754, %v1750
        %1819 = vmatprep.subr.bf16.mxu0 %v1756
        %1820 = vmatpush1.bf16.msra.mxu0 %v1755
        %1821 = vmatprep.subr.bf16.mxu0 %v1760
        %1822 = vmatpush1.bf16.msra.mxu0 %v1759
        %1823 = vmatprep.subr.bf16.mxu0 %v1764
        %1824 = vmatpush1.bf16.msra.mxu0 %v1763
        %1825 = vmatprep.subr.bf16.mxu0 %v1768
        %1826 = vmatpush1.bf16.msra.mxu0 %v1767
        %1827 = vmatprep.subr.bf16.mxu0 %v1772
        %1828 = vmatpush1.bf16.msra.mxu0 %v1771
        %1829 = vmatprep.subr.bf16.mxu0 %v1776
        %1830 = vmatpush1.bf16.msra.mxu0 %v1775
        %1831 = vmatprep.subr.bf16.mxu0 %v1780
        %1832 = vmatpush1.bf16.msra.mxu0 %v1779
        %1833 = vmatprep.subr.bf16.mxu0 %v1784
        %1834 = vmatpush1.bf16.msra.mxu0 %v1783
        %1835 = vmatprep.subr.bf16.mxu0 0
        %1836 = vmatpush1.bf16.msra.mxu0 0
        %1837 = vmatprep.subr.bf16.mxu0 0
        %1838 = vmatpush1.bf16.msra.mxu0 0
        %1839 = vmatprep.subr.bf16.mxu0 0
        %1840 = vmatpush1.bf16.msra.mxu0 0
        %1841 = vmatprep.subr.bf16.mxu0 0
        %1842 = vmatpush1.bf16.msra.mxu0 0
        %1843 = vmatprep.subr.bf16.mxu0 0
        %1844 = vmatpush1.bf16.msra.mxu0 0
        %1845 = vmatprep.subr.bf16.mxu0 0
        %1846 = vmatpush1.bf16.msra.mxu0 0
        %1847 = vmatprep.subr.bf16.mxu0 0
        %1848 = vmatpush1.bf16.msra.mxu0 0
        %1849 = vmatprep.subr.bf16.mxu0 0
        %1850 = vmatpush1.bf16.msra.mxu0 0
        %1851 = vmatprep.mubr.bf16.mxu0 0
        %1852 = vmatmul.mubr.bf16.gmra.mrb[0].mxu0 %v1604
        %v1853 = vpop.f32.mrb[0].mxu0
        %v1854 = vadd.f32 %v1642, %v1853
        %v1855 = vpop.f32.mrb[0].mxu0
        %v1856 = vadd.f32 %v1646, %v1855
        %v1857 = vpop.f32.mrb[0].mxu0
        %v1858 = vadd.f32 %v1642, %v1857
        %v1859 = vpop.f32.mrb[0].mxu0
        %v1860 = vadd.f32 %v1646, %v1859
        %1861 = vdwg.mxu0
        %1862 = vmatprep.subr.bf16.mxu0 %v1758
        %1863 = vmatpush1.bf16.msra.mxu0 %v1757
        %1864 = vmatprep.subr.bf16.mxu0 %v1762
        %1865 = vmatpush1.bf16.msra.mxu0 %v1761
        %1866 = vmatprep.subr.bf16.mxu0 %v1766
        %1867 = vmatpush1.bf16.msra.mxu0 %v1765
        %1868 = vmatprep.subr.bf16.mxu0 %v1770
        %1869 = vmatpush1.bf16.msra.mxu0 %v1769
        %1870 = vmatprep.subr.bf16.mxu0 %v1774
        %1871 = vmatpush1.bf16.msra.mxu0 %v1773
        %1872 = vmatprep.subr.bf16.mxu0 %v1778
        %1873 = vmatpush1.bf16.msra.mxu0 %v1777
        %1874 = vmatprep.subr.bf16.mxu0 %v1782
        %1875 = vmatpush1.bf16.msra.mxu0 %v1781
        %1876 = vmatprep.subr.bf16.mxu0 %v1786
        %1877 = vmatpush1.bf16.msra.mxu0 %v1785
        %1878 = vmatprep.subr.bf16.mxu0 0
        %1879 = vmatpush1.bf16.msra.mxu0 0
        %1880 = vmatprep.subr.bf16.mxu0 0
        %1881 = vmatpush1.bf16.msra.mxu0 0
        %1882 = vmatprep.subr.bf16.mxu0 0
        %1883 = vmatpush1.bf16.msra.mxu0 0
        %1884 = vmatprep.subr.bf16.mxu0 0
        %1885 = vmatpush1.bf16.msra.mxu0 0
        %1886 = vmatprep.subr.bf16.mxu0 0
        %1887 = vmatpush1.bf16.msra.mxu0 0
        %1888 = vmatprep.subr.bf16.mxu0 0
        %1889 = vmatpush1.bf16.msra.mxu0 0
        %1890 = vmatprep.subr.bf16.mxu0 0
        %1891 = vmatpush1.bf16.msra.mxu0 0
        %1892 = vmatprep.subr.bf16.mxu0 0
        %1893 = vmatpush1.bf16.msra.mxu0 0
        %1894 = vmatprep.mubr.bf16.mxu0 0
        %1895 = vmatmul.mubr.bf16.gmra.mrb[0].mxu0 %v1604
        %v1896 = vpop.f32.mrb[0].mxu0
        %v1897 = vadd.f32 %v1650, %v1896
        %v1898 = vpop.f32.mrb[0].mxu0
        %v1899 = vadd.f32 %v1654, %v1898
        %v1900 = vpop.f32.mrb[0].mxu0
        %v1901 = vadd.f32 %v1650, %v1900
        %v1902 = vpop.f32.mrb[0].mxu0
        %v1903 = vadd.f32 %v1654, %v1902
        %1904 = vdwg.mxu0
        %v1905 = vmax.f32 %v1854, 0.0
        %v1906 = vmax.f32 %v1856, 0.0
        %v1907 = vmax.f32 %v1897, 0.0
        %v1908 = vmax.f32 %v1899, 0.0
        %v1909 = vmax.f32 %v1858, 0.0
        %v1910 = vmax.f32 %v1860, 0.0
        %v1911 = vmax.f32 %v1901, 0.0
        %v1912 = vmax.f32 %v1903, 0.0
        %v1913 = vpack.c.bf16 %v1909, %v1905
        %v1914 = vpack.c.bf16 %v1910, %v1906
        %v1915 = vpack.c.bf16 %v1911, %v1907
        %v1916 = vpack.c.bf16 %v1912, %v1908
        %v1917 = vld [vmem:[%s724] sm:$0xf]
        %v1918 = vld [vmem:[%s724 + $0x4] sm:$0xf]
        %v1919 = vld [vmem:[%s724 + $0x8] sm:$0xf]
        %v1920 = vld [vmem:[%s724 + $0xc] sm:$0xf]
        %v1921 = vld [vmem:[%s724 + $0x10] sm:$0xf]
        %v1922 = vld [vmem:[%s724 + $0x14] sm:$0xf]
        %v1923 = vld [vmem:[%s724 + $0x18] sm:$0xf]
        %v1924 = vld [vmem:[%s724 + $0x1c] sm:$0xf]
        %v1925 = vld [vmem:[%s724 + $0x20] sm:$0xf]
        %v1926 = vld [vmem:[%s724 + $0x24] sm:$0xf]
        %v1927 = vld [vmem:[%s724 + $0x28] sm:$0xf]
        %v1928 = vld [vmem:[%s724 + $0x2c] sm:$0xf]
        %v1929 = vld [vmem:[%s724 + $0x30] sm:$0xf]
        %v1930 = vld [vmem:[%s724 + $0x34] sm:$0xf]
        %v1931 = vld [vmem:[%s724 + $0x38] sm:$0xf]
        %v1932 = vld [vmem:[%s724 + $0x3c] sm:$0xf]
        %v1933 = vld [vmem:[%s724 + $0x40] sm:$0xf]
        %v1934 = vld [vmem:[%s724 + $0x44] sm:$0xf]
        %v1935 = vld [vmem:[%s724 + $0x48] sm:$0xf]
        %v1936 = vld [vmem:[%s724 + $0x4c] sm:$0xf]
        %v1937 = vld [vmem:[%s724 + $0x50] sm:$0xf]
        %v1938 = vld [vmem:[%s724 + $0x54] sm:$0xf]
        %v1939 = vld [vmem:[%s724 + $0x58] sm:$0xf]
        %v1940 = vld [vmem:[%s724 + $0x5c] sm:$0xf]
        %v1941 = vld [vmem:[%s724 + $0x60] sm:$0xf]
        %v1942 = vld [vmem:[%s724 + $0x64] sm:$0xf]
        %v1943 = vld [vmem:[%s724 + $0x68] sm:$0xf]
        %v1944 = vld [vmem:[%s724 + $0x6c] sm:$0xf]
        %v1945 = vld [vmem:[%s724 + $0x70] sm:$0xf]
        %v1946 = vld [vmem:[%s724 + $0x74] sm:$0xf]
        %v1947 = vld [vmem:[%s724 + $0x78] sm:$0xf]
        %v1948 = vld [vmem:[%s724 + $0x7c] sm:$0xf]
        %v1949 = vld [vmem:[%s724 + $0x80] sm:$0xf]
        %v1950 = vld [vmem:[%s724 + $0x84] sm:$0xf]
        %v1951 = vld [vmem:[%s724 + $0x88] sm:$0xf]
        %v1952 = vld [vmem:[%s724 + $0x8c] sm:$0xf]
        %v1953 = vld [vmem:[%s724 + $0x90] sm:$0xf]
        %v1954 = vld [vmem:[%s724 + $0x94] sm:$0xf]
        %v1955 = vld [vmem:[%s724 + $0x98] sm:$0xf]
        %v1956 = vld [vmem:[%s724 + $0x9c] sm:$0xf]
        %v1957 = vld [vmem:[%s724 + $0xa0] sm:$0xf]
        %v1958 = vld [vmem:[%s724 + $0xa4] sm:$0xf]
        %v1959 = vld [vmem:[%s724 + $0xa8] sm:$0xf]
        %v1960 = vld [vmem:[%s724 + $0xac] sm:$0xf]
        %v1961 = vld [vmem:[%s724 + $0xb0] sm:$0xf]
        %v1962 = vld [vmem:[%s724 + $0xb4] sm:$0xf]
        %v1963 = vld [vmem:[%s724 + $0xb8] sm:$0xf]
        %v1964 = vld [vmem:[%s724 + $0xbc] sm:$0xf]
        %v1965 = vld [vmem:[%s724 + $0xc0] sm:$0xf]
        %v1966 = vld [vmem:[%s724 + $0xc4] sm:$0xf]
        %v1967 = vld [vmem:[%s724 + $0xc8] sm:$0xf]
        %v1968 = vld [vmem:[%s724 + $0xcc] sm:$0xf]
        %v1969 = vld [vmem:[%s724 + $0xd0] sm:$0xf]
        %v1970 = vld [vmem:[%s724 + $0xd4] sm:$0xf]
        %v1971 = vld [vmem:[%s724 + $0xd8] sm:$0xf]
        %v1972 = vld [vmem:[%s724 + $0xdc] sm:$0xf]
        %v1973 = vld [vmem:[%s724 + $0xe0] sm:$0xf]
        %v1974 = vld [vmem:[%s724 + $0xe4] sm:$0xf]
        %v1975 = vld [vmem:[%s724 + $0xe8] sm:$0xf]
        %v1976 = vld [vmem:[%s724 + $0xec] sm:$0xf]
        %v1977 = vld [vmem:[%s724 + $0xf0] sm:$0xf]
        %v1978 = vld [vmem:[%s724 + $0xf4] sm:$0xf]
        %v1979 = vld [vmem:[%s724 + $0xf8] sm:$0xf]
        %v1980 = vld [vmem:[%s724 + $0xfc] sm:$0xf]
        %v1981 = vld [vmem:[%s872] sm:$0x1]
        %v1983 = vlaneseq
        %v1984 = vshrl.u32 %v1983, 7
        %v1985 = vsub.s32 0, %v1984
        %v1986 = vrot.slane %v1981, %v1985
        %v2052 = vunpack.c.l.b16 %v1917
        %v2053 = vunpack.c.l.b16 %v1918
        %v2054 = vunpack.c.l.b16 %v1919
        %v2055 = vunpack.c.l.b16 %v1920
        %v2056 = vunpack.c.l.b16 %v1921
        %v2057 = vunpack.c.l.b16 %v1922
        %v2058 = vunpack.c.l.b16 %v1923
        %v2059 = vunpack.c.l.b16 %v1924
        %v2060 = vunpack.c.l.b16 %v1925
        %v2061 = vunpack.c.l.b16 %v1926
        %v2062 = vunpack.c.l.b16 %v1927
        %v2063 = vunpack.c.l.b16 %v1928
        %v2064 = vunpack.c.l.b16 %v1929
        %v2065 = vunpack.c.l.b16 %v1930
        %v2066 = vunpack.c.l.b16 %v1931
        %v2067 = vunpack.c.l.b16 %v1932
        %v2068 = vunpack.c.l.b16 %v1933
        %v2069 = vunpack.c.l.b16 %v1934
        %v2070 = vunpack.c.l.b16 %v1935
        %v2071 = vunpack.c.l.b16 %v1936
        %v2072 = vunpack.c.l.b16 %v1937
        %v2073 = vunpack.c.l.b16 %v1938
        %v2074 = vunpack.c.l.b16 %v1939
        %v2075 = vunpack.c.l.b16 %v1940
        %v2076 = vunpack.c.l.b16 %v1941
        %v2077 = vunpack.c.l.b16 %v1942
        %v2078 = vunpack.c.l.b16 %v1943
        %v2079 = vunpack.c.l.b16 %v1944
        %v2080 = vunpack.c.l.b16 %v1945
        %v2081 = vunpack.c.l.b16 %v1946
        %v2082 = vunpack.c.l.b16 %v1947
        %v2083 = vunpack.c.l.b16 %v1948
        %v2084 = vunpack.c.l.b16 %v1949
        %v2085 = vunpack.c.l.b16 %v1950
        %v2086 = vunpack.c.l.b16 %v1951
        %v2087 = vunpack.c.l.b16 %v1952
        %v2088 = vunpack.c.l.b16 %v1953
        %v2089 = vunpack.c.l.b16 %v1954
        %v2090 = vunpack.c.l.b16 %v1955
        %v2091 = vunpack.c.l.b16 %v1956
        %v2092 = vunpack.c.l.b16 %v1957
        %v2093 = vunpack.c.l.b16 %v1958
        %v2094 = vunpack.c.l.b16 %v1959
        %v2095 = vunpack.c.l.b16 %v1960
        %v2096 = vunpack.c.l.b16 %v1961
        %v2097 = vunpack.c.l.b16 %v1962
        %v2098 = vunpack.c.l.b16 %v1963
        %v2099 = vunpack.c.l.b16 %v1964
        %v2100 = vunpack.c.l.b16 %v1965
        %v2101 = vunpack.c.l.b16 %v1966
        %v2102 = vunpack.c.l.b16 %v1967
        %v2103 = vunpack.c.l.b16 %v1968
        %v2104 = vunpack.c.l.b16 %v1969
        %v2105 = vunpack.c.l.b16 %v1970
        %v2106 = vunpack.c.l.b16 %v1971
        %v2107 = vunpack.c.l.b16 %v1972
        %v2108 = vunpack.c.l.b16 %v1973
        %v2109 = vunpack.c.l.b16 %v1974
        %v2110 = vunpack.c.l.b16 %v1975
        %v2111 = vunpack.c.l.b16 %v1976
        %v2112 = vunpack.c.l.b16 %v1977
        %v2113 = vunpack.c.l.b16 %v1978
        %v2114 = vunpack.c.l.b16 %v1979
        %v2115 = vunpack.c.l.b16 %v1980
        %v2116 = vpack.c.b16 %v2053, %v2052
        %v2117 = vpack.c.b16 %v2055, %v2054
        %v2118 = vpack.c.b16 %v2057, %v2056
        %v2119 = vpack.c.b16 %v2059, %v2058
        %v2120 = vpack.c.b16 %v2061, %v2060
        %v2121 = vpack.c.b16 %v2063, %v2062
        %v2122 = vpack.c.b16 %v2065, %v2064
        %v2123 = vpack.c.b16 %v2067, %v2066
        %v2124 = vpack.c.b16 %v2069, %v2068
        %v2125 = vpack.c.b16 %v2071, %v2070
        %v2126 = vpack.c.b16 %v2073, %v2072
        %v2127 = vpack.c.b16 %v2075, %v2074
        %v2128 = vpack.c.b16 %v2077, %v2076
        %v2129 = vpack.c.b16 %v2079, %v2078
        %v2130 = vpack.c.b16 %v2081, %v2080
        %v2131 = vpack.c.b16 %v2083, %v2082
        %v2132 = vpack.c.b16 %v2085, %v2084
        %v2133 = vpack.c.b16 %v2087, %v2086
        %v2134 = vpack.c.b16 %v2089, %v2088
        %v2135 = vpack.c.b16 %v2091, %v2090
        %v2136 = vpack.c.b16 %v2093, %v2092
        %v2137 = vpack.c.b16 %v2095, %v2094
        %v2138 = vpack.c.b16 %v2097, %v2096
        %v2139 = vpack.c.b16 %v2099, %v2098
        %v2140 = vpack.c.b16 %v2101, %v2100
        %v2141 = vpack.c.b16 %v2103, %v2102
        %v2142 = vpack.c.b16 %v2105, %v2104
        %v2143 = vpack.c.b16 %v2107, %v2106
        %v2144 = vpack.c.b16 %v2109, %v2108
        %v2145 = vpack.c.b16 %v2111, %v2110
        %v2146 = vpack.c.b16 %v2113, %v2112
        %v2147 = vpack.c.b16 %v2115, %v2114
        %2180 = vmatprep.subr.bf16.mxu0 0
        %2181 = vmatpush1.bf16.msra.mxu0 %v2116
        %2182 = vmatprep.subr.bf16.mxu0 0
        %2183 = vmatpush1.bf16.msra.mxu0 %v2117
        %2184 = vmatprep.subr.bf16.mxu0 0
        %2185 = vmatpush1.bf16.msra.mxu0 %v2118
        %2186 = vmatprep.subr.bf16.mxu0 0
        %2187 = vmatpush1.bf16.msra.mxu0 %v2119
        %2188 = vmatprep.subr.bf16.mxu0 0
        %2189 = vmatpush1.bf16.msra.mxu0 %v2120
        %2190 = vmatprep.subr.bf16.mxu0 0
        %2191 = vmatpush1.bf16.msra.mxu0 %v2121
        %2192 = vmatprep.subr.bf16.mxu0 0
        %2193 = vmatpush1.bf16.msra.mxu0 %v2122
        %2194 = vmatprep.subr.bf16.mxu0 0
        %2195 = vmatpush1.bf16.msra.mxu0 %v2123
        %2196 = vmatprep.subr.bf16.mxu0 0
        %2197 = vmatpush1.bf16.msra.mxu0 %v2124
        %2198 = vmatprep.subr.bf16.mxu0 0
        %2199 = vmatpush1.bf16.msra.mxu0 %v2125
        %2200 = vmatprep.subr.bf16.mxu0 0
        %2201 = vmatpush1.bf16.msra.mxu0 %v2126
        %2202 = vmatprep.subr.bf16.mxu0 0
        %2203 = vmatpush1.bf16.msra.mxu0 %v2127
        %2204 = vmatprep.subr.bf16.mxu0 0
        %2205 = vmatpush1.bf16.msra.mxu0 %v2128
        %2206 = vmatprep.subr.bf16.mxu0 0
        %2207 = vmatpush1.bf16.msra.mxu0 %v2129
        %2208 = vmatprep.subr.bf16.mxu0 0
        %2209 = vmatpush1.bf16.msra.mxu0 %v2130
        %2210 = vmatprep.subr.bf16.mxu0 0
        %2211 = vmatpush1.bf16.msra.mxu0 %v2131
        %2212 = vmatprep.mubr.bf16.mxu0 %v1914
        %2213 = vmatmul.mubr.bf16.gmra.mrb[0].mxu0 %v1913
        %v2214 = vpop.f32.mrb[0].mxu0
        %v2215 = vadd.f32 %v1986, %v2214
        %v2216 = vpop.f32.mrb[0].mxu0
        %v2217 = vpop.f32.mrb[0].mxu0
        %v2218 = vadd.f32 %v1986, %v2217
        %v2219 = vpop.f32.mrb[0].mxu0
        %2220 = vdwg.mxu0
        %2221 = vmatprep.subr.bf16.mxu0 0
        %2222 = vmatpush1.bf16.msra.mxu0 %v2132
        %2223 = vmatprep.subr.bf16.mxu0 0
        %2224 = vmatpush1.bf16.msra.mxu0 %v2133
        %2225 = vmatprep.subr.bf16.mxu0 0
        %2226 = vmatpush1.bf16.msra.mxu0 %v2134
        %2227 = vmatprep.subr.bf16.mxu0 0
        %2228 = vmatpush1.bf16.msra.mxu0 %v2135
        %2229 = vmatprep.subr.bf16.mxu0 0
        %2230 = vmatpush1.bf16.msra.mxu0 %v2136
        %2231 = vmatprep.subr.bf16.mxu0 0
        %2232 = vmatpush1.bf16.msra.mxu0 %v2137
        %2233 = vmatprep.subr.bf16.mxu0 0
        %2234 = vmatpush1.bf16.msra.mxu0 %v2138
        %2235 = vmatprep.subr.bf16.mxu0 0
        %2236 = vmatpush1.bf16.msra.mxu0 %v2139
        %2237 = vmatprep.subr.bf16.mxu0 0
        %2238 = vmatpush1.bf16.msra.mxu0 %v2140
        %2239 = vmatprep.subr.bf16.mxu0 0
        %2240 = vmatpush1.bf16.msra.mxu0 %v2141
        %2241 = vmatprep.subr.bf16.mxu0 0
        %2242 = vmatpush1.bf16.msra.mxu0 %v2142
        %2243 = vmatprep.subr.bf16.mxu0 0
        %2244 = vmatpush1.bf16.msra.mxu0 %v2143
        %2245 = vmatprep.subr.bf16.mxu0 0
        %2246 = vmatpush1.bf16.msra.mxu0 %v2144
        %2247 = vmatprep.subr.bf16.mxu0 0
        %2248 = vmatpush1.bf16.msra.mxu0 %v2145
        %2249 = vmatprep.subr.bf16.mxu0 0
        %2250 = vmatpush1.bf16.msra.mxu0 %v2146
        %2251 = vmatprep.subr.bf16.mxu0 0
        %2252 = vmatpush1.bf16.msra.mxu0 %v2147
        %2253 = vmatprep.mubr.bf16.mxu0 %v1916
        %2254 = vmatmul.mubr.bf16.gmra.mrb[0].mxu0 %v1915
        %v2255 = vpop.f32.mrb[0].mxu0
        %v2256 = vadd.f32 %v2215, %v2255
        %v2257 = vpop.f32.mrb[0].mxu0
        %v2258 = vpop.f32.mrb[0].mxu0
        %v2259 = vadd.f32 %v2218, %v2258
        %v2260 = vpop.f32.mrb[0].mxu0
        %2261 = vdwg.mxu0
        %v2262 = vadd.f32 %v1602, %v2256
        %v2263 = vadd.f32 %v1603, %v2259
        %v2264 = vld [vmem:[%s732] sm:$0x1]
        %v2265 = vld [vmem:[%s740] sm:$0x1]
        %2266 = vadd.xlane.f32.xlu0 %v2262
        %v2267 = vpop.xlane.xlu0 %2266
        %2268 = vadd.xlane.f32.xlu0 %v2263
        %v2269 = vpop.xlane.xlu0 %2268
        %v2270 = vmul.f32 %v2267, %v1569
        %v2271 = vmul.f32 %v2269, %v1569
        %v2272 = vsub.f32 %v2262, %v2270
        %v2273 = vsub.f32 %v2263, %v2271
        %v2274 = vmul.f32 %v2272, %v2272
        %v2275 = vmul.f32 %v2273, %v2273
        %2276 = vadd.xlane.f32.xlu0 %v2274
        %v2277 = vpop.xlane.xlu0 %2276
        %2278 = vadd.xlane.f32.xlu0 %v2275
        %v2279 = vpop.xlane.xlu0 %2278
        %v2280 = vmul.f32 %v2277, %v1569
        %v2281 = vmul.f32 %v2279, %v1569
        %v2282 = vadd.f32 %v2280, 1e-05
        %v2283 = vadd.f32 %v2281, 1e-05
        %v2284 = vrsqrt.pop %v2282
        %v2285 = vrsqrt.pop %v2283
        %v2286 = vmul.f32 %v2272, %v2284
        %v2287 = vmul.f32 %v2273, %v2285
        %v2289 = vlaneseq
        %v2290 = vshrl.u32 %v2289, 7
        %v2291 = vsub.s32 0, %v2290
        %v2292 = vrot.slane %v2264, %v2291
        %v2294 = vmul.f32 %v2286, %v2292
        %v2295 = vmul.f32 %v2287, %v2292
        %v2297 = vlaneseq
        %v2298 = vshrl.u32 %v2297, 7
        %v2299 = vsub.s32 0, %v2298
        %v2300 = vrot.slane %v2265, %v2299
        %v2302 = vadd.f32 %v2294, %v2300
        %v2303 = vadd.f32 %v2295, %v2300
        %2304 = vst [vmem:[#allocation2] sm:$0xff] %v2302
        %2305 = vst [vmem:[#allocation2 + $0x8] sm:$0xff] %v2303
        %p2306 = scmp.eq.s32.totalorder %s44, 3
        // Predicated region
        $region121: #{jarvis_forward.1} parent=87 // pred_check
          %p2307 = pneg %p2306
        $region122: #{jarvis_forward.1} parent=87 // pred_check_branch
          %2309 = sbr.rel (%p2307) target = $region124
        $region123: #{jarvis_forward.1} parent=87 // pred_region
          %v2310 = vpack.c.bf16 %v2303, %v2302
          %v2311 = vld [vmem:[#allocation12] sm:$0xf]
          %v2312 = vld [vmem:[#allocation12 + $0x4] sm:$0xf]
          %v2313 = vld [vmem:[#allocation12 + $0x8] sm:$0xf]
          %v2314 = vld [vmem:[#allocation12 + $0xc] sm:$0xf]
          %v2315 = vld [vmem:[#allocation12 + $0x10] sm:$0xf]
          %v2316 = vld [vmem:[#allocation12 + $0x14] sm:$0xf]
          %v2317 = vld [vmem:[#allocation12 + $0x18] sm:$0xf]
          %v2318 = vld [vmem:[#allocation12 + $0x1c] sm:$0xf]
          %v2319 = vld [vmem:[#allocation12 + $0x20] sm:$0xf]
          %v2320 = vld [vmem:[#allocation12 + $0x24] sm:$0xf]
          %v2321 = vld [vmem:[#allocation12 + $0x28] sm:$0xf]
          %v2322 = vld [vmem:[#allocation12 + $0x2c] sm:$0xf]
          %v2323 = vld [vmem:[#allocation12 + $0x30] sm:$0xf]
          %v2324 = vld [vmem:[#allocation12 + $0x34] sm:$0xf]
          %v2325 = vld [vmem:[#allocation12 + $0x38] sm:$0xf]
          %v2326 = vld [vmem:[#allocation12 + $0x3c] sm:$0xf]
          %v2327 = vld [vmem:[#allocation14] sm:$0x1]
          %v2329 = vlaneseq
          %v2330 = vshrl.u32 %v2329, 7
          %v2331 = vsub.s32 0, %v2330
          %v2332 = vrot.slane %v2327, %v2331
          %v2350 = vunpack.c.l.b16 %v2311
          %v2351 = vunpack.c.l.b16 %v2312
          %v2352 = vunpack.c.l.b16 %v2313
          %v2353 = vunpack.c.l.b16 %v2314
          %v2354 = vunpack.c.l.b16 %v2315
          %v2355 = vunpack.c.l.b16 %v2316
          %v2356 = vunpack.c.l.b16 %v2317
          %v2357 = vunpack.c.l.b16 %v2318
          %v2358 = vunpack.c.l.b16 %v2319
          %v2359 = vunpack.c.l.b16 %v2320
          %v2360 = vunpack.c.l.b16 %v2321
          %v2361 = vunpack.c.l.b16 %v2322
          %v2362 = vunpack.c.l.b16 %v2323
          %v2363 = vunpack.c.l.b16 %v2324
          %v2364 = vunpack.c.l.b16 %v2325
          %v2365 = vunpack.c.l.b16 %v2326
          %v2366 = vpack.c.b16 %v2351, %v2350
          %v2367 = vpack.c.b16 %v2353, %v2352
          %v2368 = vpack.c.b16 %v2355, %v2354
          %v2369 = vpack.c.b16 %v2357, %v2356
          %v2370 = vpack.c.b16 %v2359, %v2358
          %v2371 = vpack.c.b16 %v2361, %v2360
          %v2372 = vpack.c.b16 %v2363, %v2362
          %v2373 = vpack.c.b16 %v2365, %v2364
          %2382 = vmatprep.subr.bf16.mxu0 0
          %2383 = vmatpush1.bf16.msra.mxu0 %v2366
          %2384 = vmatprep.subr.bf16.mxu0 0
          %2385 = vmatpush1.bf16.msra.mxu0 %v2367
          %2386 = vmatprep.subr.bf16.mxu0 0
          %2387 = vmatpush1.bf16.msra.mxu0 %v2368
          %2388 = vmatprep.subr.bf16.mxu0 0
          %2389 = vmatpush1.bf16.msra.mxu0 %v2369
          %2390 = vmatprep.subr.bf16.mxu0 0
          %2391 = vmatpush1.bf16.msra.mxu0 %v2370
          %2392 = vmatprep.subr.bf16.mxu0 0
          %2393 = vmatpush1.bf16.msra.mxu0 %v2371
          %2394 = vmatprep.subr.bf16.mxu0 0
          %2395 = vmatpush1.bf16.msra.mxu0 %v2372
          %2396 = vmatprep.subr.bf16.mxu0 0
          %2397 = vmatpush1.bf16.msra.mxu0 %v2373
          %2398 = vmatprep.subr.bf16.mxu0 0
          %2399 = vmatpush1.bf16.msra.mxu0 0
          %2400 = vmatprep.subr.bf16.mxu0 0
          %2401 = vmatpush1.bf16.msra.mxu0 0
          %2402 = vmatprep.subr.bf16.mxu0 0
          %2403 = vmatpush1.bf16.msra.mxu0 0
          %2404 = vmatprep.subr.bf16.mxu0 0
          %2405 = vmatpush1.bf16.msra.mxu0 0
          %2406 = vmatprep.subr.bf16.mxu0 0
          %2407 = vmatpush1.bf16.msra.mxu0 0
          %2408 = vmatprep.subr.bf16.mxu0 0
          %2409 = vmatpush1.bf16.msra.mxu0 0
          %2410 = vmatprep.subr.bf16.mxu0 0
          %2411 = vmatpush1.bf16.msra.mxu0 0
          %2412 = vmatprep.subr.bf16.mxu0 0
          %2413 = vmatpush1.bf16.msra.mxu0 0
          %2414 = vmatprep.mubr.bf16.mxu0 0
          %2415 = vmatmul.mubr.bf16.gmra.mrb[0].mxu0 %v2310
          %v2416 = vpop.f32.mrb[0].mxu0
          %v2417 = vadd.f32 %v2332, %v2416
          %v2418 = vpop.f32.mrb[0].mxu0
          %v2419 = vpop.f32.mrb[0].mxu0
          %v2420 = vadd.f32 %v2332, %v2419
          %v2421 = vpop.f32.mrb[0].mxu0
          %2422 = vdwg.mxu0
          %2423 = vst [vmem:[#allocation15] sm:$0xff] %v2417
          %2424 = vst [vmem:[#allocation15 + $0x8] sm:$0xff] %v2420
        $region124: #{jarvis_forward.1} parent=87 // pred_fallthru
          _
        // Predicated region
        $region125: #{jarvis_forward.1} parent=87 // pred_check
          %p2425 = pneg %p491
        $region126: #{jarvis_forward.1} parent=87 // pred_check_branch
          %2427 = sbr.rel (%p2425) target = $region128
        $region127: #{jarvis_forward.1} parent=87 // pred_region
          %s2428 = smul.u32 2, %s43
          %s2430 = ssub.s32 256, 256
          %2431 = vsyncadd [#allocation5], %s2430
          %s2432 = smul.addr %s2428, 128
          %s2433 = scalar_lea.hbm %s17, %s2432
          %s2434 = sshll.u32 [#allocation15], 4
          %s2435 = int_to_ptr.vmem [resolvable:$true] %s2434
          %2440 = dma.vmem_to_hbm [thread:$0]  %s2435, 256, %s2433, [#allocation5], 128, 128, 8
        $region128: #{jarvis_forward.1} parent=87 // pred_fallthru
          _
        // Predicated region
        $region129: #{jarvis_forward.1} parent=87 // pred_check
          %p2441 = pneg %p491
        $region130: #{jarvis_forward.1} parent=87 // pred_check_branch
          %2443 = sbr.rel (%p2441) target = $region132
        $region131: #{jarvis_forward.1} parent=87 // pred_region
          %2444 = dma.done [#allocation5], 256
        $region132: #{jarvis_forward.1} parent=87 // pred_fallthru
          _
      $region88: #{jarvis_forward.1} parent=5 // pred_fallthru
        _
      %p2445 = scmp.le.s32.totalorder 2, %s34
      // Predicated region
      $region133: #{jarvis_forward.1} parent=5 // pred_check
        %p2446 = pneg %p2445
      $region134: #{jarvis_forward.1} parent=5 // pred_check_branch
        %2448 = sbr.rel (%p2446) target = $region136
      $region135: #{jarvis_forward.1} parent=5 // pred_region
        %s2449 = ssub.s32 %s34, 2
      $region136: #{jarvis_forward.1} parent=5 // pred_fallthru
        _
    $region6: #{jarvis_forward.1} parent=1 // loop_footer
      %s38 = sadd.s32 1, %s34
    $region7: #{jarvis_forward.1} parent=1 // loop_footer_branch
      %33 = sbr.rel target = $region3
    $region8: #{jarvis_forward.1} parent=1 // loop_exit
      _
    %2450 = vsyncpa [#allocation4], 1
    %s2451 = scalar_lea.sflag [#allocation4], 1
    %2452 = vsyncpa %s2451, 1
    %2453 = vsyncpa [#allocation7], 1
    %s2454 = scalar_lea.sflag [#allocation7], 1
    %2455 = vsyncpa %s2454, 1
    %2456 = vsyncpa [#allocation10], 1
    %s2457 = scalar_lea.sflag [#allocation10], 1
    %2458 = vsyncpa %s2457, 1
    %2459 = vsyncpa [#allocation13], 1
    %2460 = vsyncpa [#allocation5], 1
    %s2461 = scalar_lea.sflag [#allocation5], 1
    %2462 = vsyncpa %s2461, 1

</llo_original>
